<compile_context>
chip_gen: v5e
topology: v5e:2x2
jax: 0.10.0
libtpu: 0.0.40
codegen_flags: <defaults>
</compile_context>

<pallas_src>
import jax
import jax.numpy as jnp
from jax.experimental import pallas as pl
from jax.experimental.pallas import tpu as pltpu

GATE_LANE = 128          # each gate gets its own 128-lane block
H_PAD = 128              # hidden state padded to one full lane width
OUT_LANE = 128           # lane-dense output head
GATE_ORDER = (0, 1, 3, 2)  # PyTorch (i, f, g, o) -> kernel (i, f, o, g)


def _lstm_feature_kernel(seq_ref, mask_ref, h0_ref, c0_ref,
                         w_ih_ref, w_hh_ref, b_ref,
                         w_out_ref, b_out_ref, out_ref, gx_ref):
    """Single invocation = both sequence branches, stacked along sublanes.

    seq_ref  : [T*Bp, F]       time-major, fused batch folded into sublanes
    mask_ref : [T*Bp, 1]       1.0 where t < length[row], else 0.0
    h0_ref   : [Bp, 128]       initial hidden (lanes >= H and pad rows are zero)
    c0_ref   : [Bp, 128]       initial cell
    w_ih_ref : [F, 4*128]      gate-k weights live in lanes [k*128, k*128+H)
    w_hh_ref : [128, 4*128]    rows >= H are zero
    b_ref    : [1, 4*128]      b_ih + b_hh, gate-lane padded
    w_out_ref: [128, 128]      rows >= H zero, cols >= O zero
    b_out_ref: [1, 128]        cols >= O zero
    out_ref  : [T*Bp, 128]     lane-dense output (wrapper slices to O)
    gx_ref   : [T*Bp, 4*128]   VMEM scratch (hoisted input projection)
    """
    TBp = seq_ref.shape[0]
    Bp = h0_ref.shape[0]
    T = TBp // Bp
    GL = GATE_LANE

    # Hoisted input projection: one matmul covering all steps of both branches.
    gx_ref[...] = (jnp.dot(seq_ref[...], w_ih_ref[...],
                           preferred_element_type=jnp.float32) + b_ref[...])

    h = h0_ref[...]
    c = c0_ref[...]
    hs = []
    for t in range(T):                       # static trip count, fully unrolled
        # Aligned, static 8-row slab read (Bp is a multiple of 8).
        gates = gx_ref[t * Bp:(t + 1) * Bp, :] + jnp.dot(
            h, w_hh_ref[...], preferred_element_type=jnp.float32)   # [Bp, 4*GL]
        sg = jax.nn.sigmoid(gates[:, :3 * GL])     # i | f | o in contiguous lanes
        g_g = jnp.tanh(gates[:, 3 * GL:])
        i_g = sg[:, 0 * GL:1 * GL]
        f_g = sg[:, 1 * GL:2 * GL]
        o_g = sg[:, 2 * GL:3 * GL]
        c = f_g * c + i_g * g_g
        h = o_g * jnp.tanh(c)
        hs.append(h)                           # kept in vregs, no per-step store

    # Deferred, masked head: zero h past length, one matmul, one dense store.
    hm = jnp.concatenate(hs, axis=0) * mask_ref[...]          # [T*Bp, 128]
    out_ref[...] = (jnp.dot(hm, w_out_ref[...],
                            preferred_element_type=jnp.float32)
                    + b_out_ref[...]).astype(out_ref.dtype)


def _prep_gates(w, H, lane):
    """[rows, 4H] gate-major cols (PyTorch i,f,g,o) -> [rows, 4*lane] in (i,f,o,g)."""
    rows = w.shape[0]
    w3 = w.reshape(rows, 4, H)[:, GATE_ORDER, :]
    w3 = jnp.pad(w3, ((0, 0), (0, 0), (0, lane - H)))
    return w3.reshape(rows, 4 * lane)


def _lstm_feature_forward_impl(seqX, seqY, maskX, maskY, params, hidden_key):
    """Mirrors LSTMfeature.forward: returns (xfeat, yfeat)."""
    w_ih, w_hh, b_ih, b_hh, w_out, b_out = params
    B, Tx, F = seqX.shape
    assert seqY.shape[0] == B, "the batchSize should be equal"
    Ty = seqY.shape[1]
    H = w_hh.shape[1]
    O = w_out.shape[0]
    assert H <= H_PAD and O <= OUT_LANE
    T = max(Tx, Ty)
    Bp = ((2 * B + 7) // 8) * 8          # fused X|Y batch, padded to full sublanes
    TBp = T * Bp

    # init_hidden uses torch.randn each forward; deterministic here via PRNGKey.
    kh, kc = jax.random.split(hidden_key)
    h0 = jax.random.normal(kh, (1, B, H), dtype=jnp.float32)[0]        # [B, H]
    c0 = jax.random.normal(kc, (1, B, H), dtype=jnp.float32)[0]        # [B, H]

    def prep_seq(s, t_in):
        return jnp.pad(s.astype(jnp.float32), ((0, 0), (0, T - t_in), (0, 0)))

    # Fuse branches along the batch/sublane axis: rows [0,B)=X, [B,2B)=Y, rest pad.
    seq_bt = jnp.concatenate([prep_seq(seqX, Tx), prep_seq(seqY, Ty)], axis=0)
    seq_bt = jnp.pad(seq_bt, ((0, Bp - 2 * B), (0, 0), (0, 0)))        # [Bp, T, F]
    seq_p = jnp.transpose(seq_bt, (1, 0, 2)).reshape(TBp, F)           # time-major

    lens = jnp.concatenate([maskX.astype(jnp.int32), maskY.astype(jnp.int32)])
    lens = jnp.pad(lens, (0, Bp - 2 * B))                               # [Bp]
    mask_p = (jnp.arange(T, dtype=jnp.int32)[:, None]
              < lens[None, :]).astype(jnp.float32).reshape(TBp, 1)

    h0_p = jnp.pad(jnp.concatenate([h0, h0], axis=0),
                   ((0, Bp - 2 * B), (0, H_PAD - H)))                   # [Bp, 128]
    c0_p = jnp.pad(jnp.concatenate([c0, c0], axis=0),
                   ((0, Bp - 2 * B), (0, H_PAD - H)))                   # [Bp, 128]

    # Weight prep: gate-lane-aligned, (i,f,o,g) order, hidden rows padded to 128.
    w_ih_p = _prep_gates(jnp.transpose(w_ih).astype(jnp.float32), H, GATE_LANE)
    w_hh_p = _prep_gates(jnp.transpose(w_hh).astype(jnp.float32), H, GATE_LANE)
    w_hh_p = jnp.pad(w_hh_p, ((0, H_PAD - H), (0, 0)))                  # [128, 512]
    b_p = _prep_gates((b_ih + b_hh).astype(jnp.float32).reshape(1, 4 * H),
                      H, GATE_LANE)                                     # [1, 512]
    w_out_p = jnp.pad(jnp.transpose(w_out).astype(jnp.float32),
                      ((0, H_PAD - H), (0, OUT_LANE - O)))              # [128, 128]
    b_out_p = jnp.pad(b_out.astype(jnp.float32).reshape(1, O),
                      ((0, 0), (0, OUT_LANE - O)))                      # [1, 128]

    vmem = pl.BlockSpec(memory_space=pltpu.MemorySpace.VMEM)

    out = pl.pallas_call(
        _lstm_feature_kernel,
        out_shape=jax.ShapeDtypeStruct((TBp, OUT_LANE), jnp.float32),
        in_specs=[vmem] * 9,
        out_specs=vmem,
        scratch_shapes=[pltpu.VMEM((TBp, 4 * GATE_LANE), jnp.float32)],
    )(seq_p, mask_p, h0_p, c0_p, w_ih_p, w_hh_p, b_p, w_out_p, b_out_p)

    out = out.reshape(T, Bp, OUT_LANE)
    xfeat = jnp.transpose(out[:Tx, 0:B, :O], (1, 0, 2))                 # [B, Tx, O]
    yfeat = jnp.transpose(out[:Ty, B:2 * B, :O], (1, 0, 2))             # [B, Ty, O]
    return xfeat, yfeat


lstm_feature_forward = jax.jit(_lstm_feature_forward_impl)


def _reference_branch(seq, lens, h0, c0, params):
    """Pure-JAX reference (matches PyTorch packed-LSTM + Linear semantics)."""
    w_ih, w_hh, b_ih, b_hh, w_out, b_out = params
    B, T, _ = seq.shape
    H = h0.shape[1]
    h, c = h0, c0
    outs = []
    for t in range(T):
        x_t = seq[:, t, :]
        gates = x_t @ w_ih.T + h @ w_hh.T + b_ih + b_hh
        i = jax.nn.sigmoid(gates[:, :H])
        f = jax.nn.sigmoid(gates[:, H:2 * H])
        g = jnp.tanh(gates[:, 2 * H:3 * H])
        o = jax.nn.sigmoid(gates[:, 3 * H:])
        c = f * c + i * g
        h = o * jnp.tanh(c)
        valid = (lens > t)[:, None]
        outs.append(jnp.where(valid, h, 0.0))
    out = jnp.stack(outs, axis=1)                                      # [B, T, H]
    return out @ w_out.T + b_out


if __name__ == "__main__":
    # Small shapes consistent with the module.
    batch = 2
    featsize = 4
    hidden_size = 8          # LSTMfeature default
    obs_size = 6
    Tx, Ty = 8, 6

    key = jax.random.PRNGKey(0)
    keys = jax.random.split(key, 10)

    # Deterministic parameter init (PyTorch-like U(-1/sqrt(H), 1/sqrt(H))).
    bound = 1.0 / jnp.sqrt(jnp.float32(hidden_size))
    w_ih = jax.random.uniform(keys[0], (4 * hidden_size, featsize),
                              minval=-bound, maxval=bound, dtype=jnp.float32)
    w_hh = jax.random.uniform(keys[1], (4 * hidden_size, hidden_size),
                              minval=-bound, maxval=bound, dtype=jnp.float32)
    b_ih = jax.random.uniform(keys[2], (4 * hidden_size,),
                              minval=-bound, maxval=bound, dtype=jnp.float32)
    b_hh = jax.random.uniform(keys[3], (4 * hidden_size,),
                              minval=-bound, maxval=bound, dtype=jnp.float32)
    w_out = jax.random.uniform(keys[4], (obs_size, hidden_size),
                               minval=-bound, maxval=bound, dtype=jnp.float32)
    b_out = jax.random.uniform(keys[5], (obs_size,),
                               minval=-bound, maxval=bound, dtype=jnp.float32)
    params = (w_ih, w_hh, b_ih, b_hh, w_out, b_out)

    # Inputs.
    seqX = jax.random.normal(keys[6], (batch, Tx, featsize), dtype=jnp.float32)
    seqY = jax.random.normal(keys[7], (batch, Ty, featsize), dtype=jnp.float32)
    maskX = jnp.array([Tx, 5], dtype=jnp.int32)   # valid lengths per batch elem
    maskY = jnp.array([Ty, 3], dtype=jnp.int32)
    hidden_key = keys[8]

    xfeat, yfeat = lstm_feature_forward(seqX, seqY, maskX, maskY, params,
                                        hidden_key)
    jax.block_until_ready((xfeat, yfeat))

    # Correctness check against a pure-JAX reference.
    kh, kc = jax.random.split(hidden_key)
    h0 = jax.random.normal(kh, (1, batch, hidden_size), dtype=jnp.float32)[0]
    c0 = jax.random.normal(kc, (1, batch, hidden_size), dtype=jnp.float32)[0]
    xref = _reference_branch(seqX, maskX, h0, c0, params)
    yref = _reference_branch(seqY, maskY, h0, c0, params)
    assert xfeat.shape == (batch, Tx, obs_size)
    assert yfeat.shape == (batch, Ty, obs_size)
    assert jnp.max(jnp.abs(xfeat - xref)) < 1e-4
    assert jnp.max(jnp.abs(yfeat - yref)) < 1e-4

    print("KERNEL_OK")
</pallas_src>

<mosaic_0001>
module attributes {stable_mosaic.version = 11 : i64} {
  func.func @_lstm_feature_kernel(%arg0: memref<64x4xf32, #tpu.memory_space<vmem>>, %arg1: memref<64x1xf32, #tpu.memory_space<vmem>>, %arg2: memref<8x128xf32, #tpu.memory_space<vmem>>, %arg3: memref<8x128xf32, #tpu.memory_space<vmem>>, %arg4: memref<4x512xf32, #tpu.memory_space<vmem>>, %arg5: memref<128x512xf32, #tpu.memory_space<vmem>>, %arg6: memref<1x512xf32, #tpu.memory_space<vmem>>, %arg7: memref<128x128xf32, #tpu.memory_space<vmem>>, %arg8: memref<1x128xf32, #tpu.memory_space<vmem>>, %arg9: memref<64x128xf32, #tpu.memory_space<vmem>>, %arg10: memref<64x512xf32, #tpu.memory_space<vmem>>) attributes {dimension_semantics = [], scalar_prefetch = 0 : i64, scratch_operands = 1 : i64, tpu.core_type = #tpu.core_type<tc>} {
    %c0 = arith.constant 0 : index
    %c0_0 = arith.constant 0 : index
    %0 = vector.load %arg0[%c0, %c0_0] : memref<64x4xf32, #tpu.memory_space<vmem>>, vector<64x4xf32>
    %c0_1 = arith.constant 0 : index
    %c0_2 = arith.constant 0 : index
    %1 = vector.load %arg4[%c0_1, %c0_2] : memref<4x512xf32, #tpu.memory_space<vmem>>, vector<4x512xf32>
    %cst = arith.constant dense<0.000000e+00> : vector<64x512xf32>
    %2 = tpu.matmul %0, %1, %cst {dimension_numbers = #tpu.dot_dimension_numbers<[1], [0], [0], [1], [0, 0, 1, 1], [], []>} : vector<64x4xf32>, vector<4x512xf32>, vector<64x512xf32> -> vector<64x512xf32>
    %c0_3 = arith.constant 0 : index
    %c0_4 = arith.constant 0 : index
    %3 = vector.load %arg6[%c0_3, %c0_4] : memref<1x512xf32, #tpu.memory_space<vmem>>, vector<1x512xf32>
    %4 = vector.broadcast %3 : vector<1x512xf32> to vector<64x512xf32>
    %5 = arith.addf %2, %4 : vector<64x512xf32>
    %c0_5 = arith.constant 0 : index
    %c0_6 = arith.constant 0 : index
    %6 = vector.load %arg10[%c0_5, %c0_6] : memref<64x512xf32, #tpu.memory_space<vmem>>, vector<64x512xf32>
    tpu.vector_store %arg10[%c0_5, %c0_6], %5 {strides = array<i32>} : memref<64x512xf32, #tpu.memory_space<vmem>>, vector<64x512xf32>,
    %c0_7 = arith.constant 0 : index
    %c0_8 = arith.constant 0 : index
    %7 = vector.load %arg2[%c0_7, %c0_8] : memref<8x128xf32, #tpu.memory_space<vmem>>, vector<8x128xf32>
    %c0_9 = arith.constant 0 : index
    %c0_10 = arith.constant 0 : index
    %8 = vector.load %arg3[%c0_9, %c0_10] : memref<8x128xf32, #tpu.memory_space<vmem>>, vector<8x128xf32>
    %c0_11 = arith.constant 0 : index
    %c0_12 = arith.constant 0 : index
    %9 = vector.load %arg10[%c0_11, %c0_12] : memref<64x512xf32, #tpu.memory_space<vmem>>, vector<8x512xf32>
    %c0_13 = arith.constant 0 : index
    %c0_14 = arith.constant 0 : index
    %10 = vector.load %arg5[%c0_13, %c0_14] : memref<128x512xf32, #tpu.memory_space<vmem>>, vector<128x512xf32>
    %cst_15 = arith.constant dense<0.000000e+00> : vector<8x512xf32>
    %11 = tpu.matmul %7, %10, %cst_15 {dimension_numbers = #tpu.dot_dimension_numbers<[1], [0], [0], [1], [0, 0, 1, 1], [], []>} : vector<8x128xf32>, vector<128x512xf32>, vector<8x512xf32> -> vector<8x512xf32>
    %12 = arith.addf %9, %11 : vector<8x512xf32>
    %13 = vector.extract_strided_slice %12 {offsets = [0, 0], sizes = [8, 384], strides = [1, 1]} : vector<8x512xf32> to vector<8x384xf32>
    %14 = arith.negf %13 : vector<8x384xf32>
    %15 = math.exp %14 : vector<8x384xf32>
    %cst_16 = arith.constant 1.000000e+00 : f32
    %16 = vector.broadcast %cst_16 : f32 to vector<8x384xf32>
    %17 = arith.addf %16, %15 : vector<8x384xf32>
    %18 = arith.divf %16, %17 : vector<8x384xf32>
    %19 = vector.extract_strided_slice %12 {offsets = [0, 384], sizes = [8, 128], strides = [1, 1]} : vector<8x512xf32> to vector<8x128xf32>
    %20 = math.tanh %19 : vector<8x128xf32>
    %21 = vector.extract_strided_slice %18 {offsets = [0, 0], sizes = [8, 128], strides = [1, 1]} : vector<8x384xf32> to vector<8x128xf32>
    %22 = vector.extract_strided_slice %18 {offsets = [0, 128], sizes = [8, 128], strides = [1, 1]} : vector<8x384xf32> to vector<8x128xf32>
    %23 = vector.extract_strided_slice %18 {offsets = [0, 256], sizes = [8, 128], strides = [1, 1]} : vector<8x384xf32> to vector<8x128xf32>
    %24 = arith.mulf %22, %8 : vector<8x128xf32>
    %25 = arith.mulf %21, %20 : vector<8x128xf32>
    %26 = arith.addf %24, %25 : vector<8x128xf32>
    %27 = math.tanh %26 : vector<8x128xf32>
    %28 = arith.mulf %23, %27 : vector<8x128xf32>
    %c8 = arith.constant 8 : index
    %c0_17 = arith.constant 0 : index
    %29 = vector.load %arg10[%c8, %c0_17] : memref<64x512xf32, #tpu.memory_space<vmem>>, vector<8x512xf32>
    %c0_18 = arith.constant 0 : index
    %c0_19 = arith.constant 0 : index
    %30 = vector.load %arg5[%c0_18, %c0_19] : memref<128x512xf32, #tpu.memory_space<vmem>>, vector<128x512xf32>
    %cst_20 = arith.constant dense<0.000000e+00> : vector<8x512xf32>
    %31 = tpu.matmul %28, %30, %cst_20 {dimension_numbers = #tpu.dot_dimension_numbers<[1], [0], [0], [1], [0, 0, 1, 1], [], []>} : vector<8x128xf32>, vector<128x512xf32>, vector<8x512xf32> -> vector<8x512xf32>
    %32 = arith.addf %29, %31 : vector<8x512xf32>
    %33 = vector.extract_strided_slice %32 {offsets = [0, 0], sizes = [8, 384], strides = [1, 1]} : vector<8x512xf32> to vector<8x384xf32>
    %34 = arith.negf %33 : vector<8x384xf32>
    %35 = math.exp %34 : vector<8x384xf32>
    %cst_21 = arith.constant 1.000000e+00 : f32
    %36 = vector.broadcast %cst_21 : f32 to vector<8x384xf32>
    %37 = arith.addf %36, %35 : vector<8x384xf32>
    %38 = arith.divf %36, %37 : vector<8x384xf32>
    %39 = vector.extract_strided_slice %32 {offsets = [0, 384], sizes = [8, 128], strides = [1, 1]} : vector<8x512xf32> to vector<8x128xf32>
    %40 = math.tanh %39 : vector<8x128xf32>
    %41 = vector.extract_strided_slice %38 {offsets = [0, 0], sizes = [8, 128], strides = [1, 1]} : vector<8x384xf32> to vector<8x128xf32>
    %42 = vector.extract_strided_slice %38 {offsets = [0, 128], sizes = [8, 128], strides = [1, 1]} : vector<8x384xf32> to vector<8x128xf32>
    %43 = vector.extract_strided_slice %38 {offsets = [0, 256], sizes = [8, 128], strides = [1, 1]} : vector<8x384xf32> to vector<8x128xf32>
    %44 = arith.mulf %42, %26 : vector<8x128xf32>
    %45 = arith.mulf %41, %40 : vector<8x128xf32>
    %46 = arith.addf %44, %45 : vector<8x128xf32>
    %47 = math.tanh %46 : vector<8x128xf32>
    %48 = arith.mulf %43, %47 : vector<8x128xf32>
    %c16 = arith.constant 16 : index
    %c0_22 = arith.constant 0 : index
    %49 = vector.load %arg10[%c16, %c0_22] : memref<64x512xf32, #tpu.memory_space<vmem>>, vector<8x512xf32>
    %c0_23 = arith.constant 0 : index
    %c0_24 = arith.constant 0 : index
    %50 = vector.load %arg5[%c0_23, %c0_24] : memref<128x512xf32, #tpu.memory_space<vmem>>, vector<128x512xf32>
    %cst_25 = arith.constant dense<0.000000e+00> : vector<8x512xf32>
    %51 = tpu.matmul %48, %50, %cst_25 {dimension_numbers = #tpu.dot_dimension_numbers<[1], [0], [0], [1], [0, 0, 1, 1], [], []>} : vector<8x128xf32>, vector<128x512xf32>, vector<8x512xf32> -> vector<8x512xf32>
    %52 = arith.addf %49, %51 : vector<8x512xf32>
    %53 = vector.extract_strided_slice %52 {offsets = [0, 0], sizes = [8, 384], strides = [1, 1]} : vector<8x512xf32> to vector<8x384xf32>
    %54 = arith.negf %53 : vector<8x384xf32>
    %55 = math.exp %54 : vector<8x384xf32>
    %cst_26 = arith.constant 1.000000e+00 : f32
    %56 = vector.broadcast %cst_26 : f32 to vector<8x384xf32>
    %57 = arith.addf %56, %55 : vector<8x384xf32>
    %58 = arith.divf %56, %57 : vector<8x384xf32>
    %59 = vector.extract_strided_slice %52 {offsets = [0, 384], sizes = [8, 128], strides = [1, 1]} : vector<8x512xf32> to vector<8x128xf32>
    %60 = math.tanh %59 : vector<8x128xf32>
    %61 = vector.extract_strided_slice %58 {offsets = [0, 0], sizes = [8, 128], strides = [1, 1]} : vector<8x384xf32> to vector<8x128xf32>
    %62 = vector.extract_strided_slice %58 {offsets = [0, 128], sizes = [8, 128], strides = [1, 1]} : vector<8x384xf32> to vector<8x128xf32>
    %63 = vector.extract_strided_slice %58 {offsets = [0, 256], sizes = [8, 128], strides = [1, 1]} : vector<8x384xf32> to vector<8x128xf32>
    %64 = arith.mulf %62, %46 : vector<8x128xf32>
    %65 = arith.mulf %61, %60 : vector<8x128xf32>
    %66 = arith.addf %64, %65 : vector<8x128xf32>
    %67 = math.tanh %66 : vector<8x128xf32>
    %68 = arith.mulf %63, %67 : vector<8x128xf32>
    %c24 = arith.constant 24 : index
    %c0_27 = arith.constant 0 : index
    %69 = vector.load %arg10[%c24, %c0_27] : memref<64x512xf32, #tpu.memory_space<vmem>>, vector<8x512xf32>
    %c0_28 = arith.constant 0 : index
    %c0_29 = arith.constant 0 : index
    %70 = vector.load %arg5[%c0_28, %c0_29] : memref<128x512xf32, #tpu.memory_space<vmem>>, vector<128x512xf32>
    %cst_30 = arith.constant dense<0.000000e+00> : vector<8x512xf32>
    %71 = tpu.matmul %68, %70, %cst_30 {dimension_numbers = #tpu.dot_dimension_numbers<[1], [0], [0], [1], [0, 0, 1, 1], [], []>} : vector<8x128xf32>, vector<128x512xf32>, vector<8x512xf32> -> vector<8x512xf32>
    %72 = arith.addf %69, %71 : vector<8x512xf32>
    %73 = vector.extract_strided_slice %72 {offsets = [0, 0], sizes = [8, 384], strides = [1, 1]} : vector<8x512xf32> to vector<8x384xf32>
    %74 = arith.negf %73 : vector<8x384xf32>
    %75 = math.exp %74 : vector<8x384xf32>
    %cst_31 = arith.constant 1.000000e+00 : f32
    %76 = vector.broadcast %cst_31 : f32 to vector<8x384xf32>
    %77 = arith.addf %76, %75 : vector<8x384xf32>
    %78 = arith.divf %76, %77 : vector<8x384xf32>
    %79 = vector.extract_strided_slice %72 {offsets = [0, 384], sizes = [8, 128], strides = [1, 1]} : vector<8x512xf32> to vector<8x128xf32>
    %80 = math.tanh %79 : vector<8x128xf32>
    %81 = vector.extract_strided_slice %78 {offsets = [0, 0], sizes = [8, 128], strides = [1, 1]} : vector<8x384xf32> to vector<8x128xf32>
    %82 = vector.extract_strided_slice %78 {offsets = [0, 128], sizes = [8, 128], strides = [1, 1]} : vector<8x384xf32> to vector<8x128xf32>
    %83 = vector.extract_strided_slice %78 {offsets = [0, 256], sizes = [8, 128], strides = [1, 1]} : vector<8x384xf32> to vector<8x128xf32>
    %84 = arith.mulf %82, %66 : vector<8x128xf32>
    %85 = arith.mulf %81, %80 : vector<8x128xf32>
    %86 = arith.addf %84, %85 : vector<8x128xf32>
    %87 = math.tanh %86 : vector<8x128xf32>
    %88 = arith.mulf %83, %87 : vector<8x128xf32>
    %c32 = arith.constant 32 : index
    %c0_32 = arith.constant 0 : index
    %89 = vector.load %arg10[%c32, %c0_32] : memref<64x512xf32, #tpu.memory_space<vmem>>, vector<8x512xf32>
    %c0_33 = arith.constant 0 : index
    %c0_34 = arith.constant 0 : index
    %90 = vector.load %arg5[%c0_33, %c0_34] : memref<128x512xf32, #tpu.memory_space<vmem>>, vector<128x512xf32>
    %cst_35 = arith.constant dense<0.000000e+00> : vector<8x512xf32>
    %91 = tpu.matmul %88, %90, %cst_35 {dimension_numbers = #tpu.dot_dimension_numbers<[1], [0], [0], [1], [0, 0, 1, 1], [], []>} : vector<8x128xf32>, vector<128x512xf32>, vector<8x512xf32> -> vector<8x512xf32>
    %92 = arith.addf %89, %91 : vector<8x512xf32>
    %93 = vector.extract_strided_slice %92 {offsets = [0, 0], sizes = [8, 384], strides = [1, 1]} : vector<8x512xf32> to vector<8x384xf32>
    %94 = arith.negf %93 : vector<8x384xf32>
    %95 = math.exp %94 : vector<8x384xf32>
    %cst_36 = arith.constant 1.000000e+00 : f32
    %96 = vector.broadcast %cst_36 : f32 to vector<8x384xf32>
    %97 = arith.addf %96, %95 : vector<8x384xf32>
    %98 = arith.divf %96, %97 : vector<8x384xf32>
    %99 = vector.extract_strided_slice %92 {offsets = [0, 384], sizes = [8, 128], strides = [1, 1]} : vector<8x512xf32> to vector<8x128xf32>
    %100 = math.tanh %99 : vector<8x128xf32>
    %101 = vector.extract_strided_slice %98 {offsets = [0, 0], sizes = [8, 128], strides = [1, 1]} : vector<8x384xf32> to vector<8x128xf32>
    %102 = vector.extract_strided_slice %98 {offsets = [0, 128], sizes = [8, 128], strides = [1, 1]} : vector<8x384xf32> to vector<8x128xf32>
    %103 = vector.extract_strided_slice %98 {offsets = [0, 256], sizes = [8, 128], strides = [1, 1]} : vector<8x384xf32> to vector<8x128xf32>
    %104 = arith.mulf %102, %86 : vector<8x128xf32>
    %105 = arith.mulf %101, %100 : vector<8x128xf32>
    %106 = arith.addf %104, %105 : vector<8x128xf32>
    %107 = math.tanh %106 : vector<8x128xf32>
    %108 = arith.mulf %103, %107 : vector<8x128xf32>
    %c40 = arith.constant 40 : index
    %c0_37 = arith.constant 0 : index
    %109 = vector.load %arg10[%c40, %c0_37] : memref<64x512xf32, #tpu.memory_space<vmem>>, vector<8x512xf32>
    %c0_38 = arith.constant 0 : index
    %c0_39 = arith.constant 0 : index
    %110 = vector.load %arg5[%c0_38, %c0_39] : memref<128x512xf32, #tpu.memory_space<vmem>>, vector<128x512xf32>
    %cst_40 = arith.constant dense<0.000000e+00> : vector<8x512xf32>
    %111 = tpu.matmul %108, %110, %cst_40 {dimension_numbers = #tpu.dot_dimension_numbers<[1], [0], [0], [1], [0, 0, 1, 1], [], []>} : vector<8x128xf32>, vector<128x512xf32>, vector<8x512xf32> -> vector<8x512xf32>
    %112 = arith.addf %109, %111 : vector<8x512xf32>
    %113 = vector.extract_strided_slice %112 {offsets = [0, 0], sizes = [8, 384], strides = [1, 1]} : vector<8x512xf32> to vector<8x384xf32>
    %114 = arith.negf %113 : vector<8x384xf32>
    %115 = math.exp %114 : vector<8x384xf32>
    %cst_41 = arith.constant 1.000000e+00 : f32
    %116 = vector.broadcast %cst_41 : f32 to vector<8x384xf32>
    %117 = arith.addf %116, %115 : vector<8x384xf32>
    %118 = arith.divf %116, %117 : vector<8x384xf32>
    %119 = vector.extract_strided_slice %112 {offsets = [0, 384], sizes = [8, 128], strides = [1, 1]} : vector<8x512xf32> to vector<8x128xf32>
    %120 = math.tanh %119 : vector<8x128xf32>
    %121 = vector.extract_strided_slice %118 {offsets = [0, 0], sizes = [8, 128], strides = [1, 1]} : vector<8x384xf32> to vector<8x128xf32>
    %122 = vector.extract_strided_slice %118 {offsets = [0, 128], sizes = [8, 128], strides = [1, 1]} : vector<8x384xf32> to vector<8x128xf32>
    %123 = vector.extract_strided_slice %118 {offsets = [0, 256], sizes = [8, 128], strides = [1, 1]} : vector<8x384xf32> to vector<8x128xf32>
    %124 = arith.mulf %122, %106 : vector<8x128xf32>
    %125 = arith.mulf %121, %120 : vector<8x128xf32>
    %126 = arith.addf %124, %125 : vector<8x128xf32>
    %127 = math.tanh %126 : vector<8x128xf32>
    %128 = arith.mulf %123, %127 : vector<8x128xf32>
    %c48 = arith.constant 48 : index
    %c0_42 = arith.constant 0 : index
    %129 = vector.load %arg10[%c48, %c0_42] : memref<64x512xf32, #tpu.memory_space<vmem>>, vector<8x512xf32>
    %c0_43 = arith.constant 0 : index
    %c0_44 = arith.constant 0 : index
    %130 = vector.load %arg5[%c0_43, %c0_44] : memref<128x512xf32, #tpu.memory_space<vmem>>, vector<128x512xf32>
    %cst_45 = arith.constant dense<0.000000e+00> : vector<8x512xf32>
    %131 = tpu.matmul %128, %130, %cst_45 {dimension_numbers = #tpu.dot_dimension_numbers<[1], [0], [0], [1], [0, 0, 1, 1], [], []>} : vector<8x128xf32>, vector<128x512xf32>, vector<8x512xf32> -> vector<8x512xf32>
    %132 = arith.addf %129, %131 : vector<8x512xf32>
    %133 = vector.extract_strided_slice %132 {offsets = [0, 0], sizes = [8, 384], strides = [1, 1]} : vector<8x512xf32> to vector<8x384xf32>
    %134 = arith.negf %133 : vector<8x384xf32>
    %135 = math.exp %134 : vector<8x384xf32>
    %cst_46 = arith.constant 1.000000e+00 : f32
    %136 = vector.broadcast %cst_46 : f32 to vector<8x384xf32>
    %137 = arith.addf %136, %135 : vector<8x384xf32>
    %138 = arith.divf %136, %137 : vector<8x384xf32>
    %139 = vector.extract_strided_slice %132 {offsets = [0, 384], sizes = [8, 128], strides = [1, 1]} : vector<8x512xf32> to vector<8x128xf32>
    %140 = math.tanh %139 : vector<8x128xf32>
    %141 = vector.extract_strided_slice %138 {offsets = [0, 0], sizes = [8, 128], strides = [1, 1]} : vector<8x384xf32> to vector<8x128xf32>
    %142 = vector.extract_strided_slice %138 {offsets = [0, 128], sizes = [8, 128], strides = [1, 1]} : vector<8x384xf32> to vector<8x128xf32>
    %143 = vector.extract_strided_slice %138 {offsets = [0, 256], sizes = [8, 128], strides = [1, 1]} : vector<8x384xf32> to vector<8x128xf32>
    %144 = arith.mulf %142, %126 : vector<8x128xf32>
    %145 = arith.mulf %141, %140 : vector<8x128xf32>
    %146 = arith.addf %144, %145 : vector<8x128xf32>
    %147 = math.tanh %146 : vector<8x128xf32>
    %148 = arith.mulf %143, %147 : vector<8x128xf32>
    %c56 = arith.constant 56 : index
    %c0_47 = arith.constant 0 : index
    %149 = vector.load %arg10[%c56, %c0_47] : memref<64x512xf32, #tpu.memory_space<vmem>>, vector<8x512xf32>
    %c0_48 = arith.constant 0 : index
    %c0_49 = arith.constant 0 : index
    %150 = vector.load %arg5[%c0_48, %c0_49] : memref<128x512xf32, #tpu.memory_space<vmem>>, vector<128x512xf32>
    %cst_50 = arith.constant dense<0.000000e+00> : vector<8x512xf32>
    %151 = tpu.matmul %148, %150, %cst_50 {dimension_numbers = #tpu.dot_dimension_numbers<[1], [0], [0], [1], [0, 0, 1, 1], [], []>} : vector<8x128xf32>, vector<128x512xf32>, vector<8x512xf32> -> vector<8x512xf32>
    %152 = arith.addf %149, %151 : vector<8x512xf32>
    %153 = vector.extract_strided_slice %152 {offsets = [0, 0], sizes = [8, 384], strides = [1, 1]} : vector<8x512xf32> to vector<8x384xf32>
    %154 = arith.negf %153 : vector<8x384xf32>
    %155 = math.exp %154 : vector<8x384xf32>
    %cst_51 = arith.constant 1.000000e+00 : f32
    %156 = vector.broadcast %cst_51 : f32 to vector<8x384xf32>
    %157 = arith.addf %156, %155 : vector<8x384xf32>
    %158 = arith.divf %156, %157 : vector<8x384xf32>
    %159 = vector.extract_strided_slice %152 {offsets = [0, 384], sizes = [8, 128], strides = [1, 1]} : vector<8x512xf32> to vector<8x128xf32>
    %160 = math.tanh %159 : vector<8x128xf32>
    %161 = vector.extract_strided_slice %158 {offsets = [0, 0], sizes = [8, 128], strides = [1, 1]} : vector<8x384xf32> to vector<8x128xf32>
    %162 = vector.extract_strided_slice %158 {offsets = [0, 128], sizes = [8, 128], strides = [1, 1]} : vector<8x384xf32> to vector<8x128xf32>
    %163 = vector.extract_strided_slice %158 {offsets = [0, 256], sizes = [8, 128], strides = [1, 1]} : vector<8x384xf32> to vector<8x128xf32>
    %164 = arith.mulf %162, %146 : vector<8x128xf32>
    %165 = arith.mulf %161, %160 : vector<8x128xf32>
    %166 = arith.addf %164, %165 : vector<8x128xf32>
    %167 = math.tanh %166 : vector<8x128xf32>
    %168 = arith.mulf %163, %167 : vector<8x128xf32>
    %169 = tpu.concatenate %28, %48, %68, %88, %108, %128, %148, %168 in 0 : vector<8x128xf32>, vector<8x128xf32>, vector<8x128xf32>, vector<8x128xf32>, vector<8x128xf32>, vector<8x128xf32>, vector<8x128xf32>, vector<8x128xf32> -> vector<64x128xf32>
    %c0_52 = arith.constant 0 : index
    %c0_53 = arith.constant 0 : index
    %170 = vector.load %arg1[%c0_52, %c0_53] : memref<64x1xf32, #tpu.memory_space<vmem>>, vector<64x1xf32>
    %171 = vector.broadcast %170 : vector<64x1xf32> to vector<64x128xf32>
    %172 = arith.mulf %169, %171 : vector<64x128xf32>
    %c0_54 = arith.constant 0 : index
    %c0_55 = arith.constant 0 : index
    %173 = vector.load %arg7[%c0_54, %c0_55] : memref<128x128xf32, #tpu.memory_space<vmem>>, vector<128x128xf32>
    %cst_56 = arith.constant dense<0.000000e+00> : vector<64x128xf32>
    %174 = tpu.matmul %172, %173, %cst_56 {dimension_numbers = #tpu.dot_dimension_numbers<[1], [0], [0], [1], [0, 0, 1, 1], [], []>} : vector<64x128xf32>, vector<128x128xf32>, vector<64x128xf32> -> vector<64x128xf32>
    %c0_57 = arith.constant 0 : index
    %c0_58 = arith.constant 0 : index
    %175 = vector.load %arg8[%c0_57, %c0_58] : memref<1x128xf32, #tpu.memory_space<vmem>>, vector<1x128xf32>
    %176 = vector.broadcast %175 : vector<1x128xf32> to vector<64x128xf32>
    %177 = arith.addf %174, %176 : vector<64x128xf32>
    %c0_59 = arith.constant 0 : index
    %c0_60 = arith.constant 0 : index
    %178 = vector.load %arg9[%c0_59, %c0_60] : memref<64x128xf32, #tpu.memory_space<vmem>>, vector<64x128xf32>
    tpu.vector_store %arg9[%c0_59, %c0_60], %177 {strides = array<i32>} : memref<64x128xf32, #tpu.memory_space<vmem>>, vector<64x128xf32>,
    return
  }
}

</mosaic_0001>

<llo_original>
// kernel: _lstm_feature_forward_impl.3
$region0: #{_lstm_feature_forward_impl.3}
  #allocation0 [shape = 'u32[]', space=smem, size = 0x4, offset = 0x4, fixed_abs, tag = 'smem constant byte address 0x4 - core index']
  #allocation1 [shape = 'u32[72,128]{1,0:T(1,128)}', space=vmem, size = 0x9000, scoped, tag = 'internal scratch']
  #allocation2 [shape = 'f32[64,512]{1,0:T(8,128)}', space=vmem, size = 0x20000, scoped, tag = 'scratch operand']
  %s0 = inlined_call_operand.vmem [shape: f32[64,4], index: 0, kind: input, shape index: {}]
  %s1 = inlined_call_operand.vmem [shape: f32[64,1], index: 1, kind: input, shape index: {}]
  %s2 = inlined_call_operand.vmem [shape: f32[8,128], index: 2, kind: input, shape index: {}]
  %s3 = inlined_call_operand.vmem [shape: f32[8,128], index: 3, kind: input, shape index: {}]
  %s4 = inlined_call_operand.vmem [shape: f32[4,512], index: 4, kind: input, shape index: {}]
  %s5 = inlined_call_operand.vmem [shape: f32[128,512], index: 5, kind: input, shape index: {}]
  %s6 = inlined_call_operand.vmem [shape: f32[1,512], index: 6, kind: input, shape index: {}]
  %s7 = inlined_call_operand.vmem [shape: f32[128,128], index: 7, kind: input, shape index: {}]
  %s8 = inlined_call_operand.vmem [shape: f32[1,128], index: 8, kind: input, shape index: {}]
  %s9 = inlined_call_operand.vmem [shape: f32[64,128], index: 9, kind: output, shape index: {}]
  %s10 = sld [smem:[#allocation0]]
  $region46: #{_lstm_feature_forward_impl.3} parent=0
    _
  %s12 = ssub.s32 1, %s10
  %s13 = scalar_select 0, %s12, %s10
  // Predicated region
  $region2: #{_lstm_feature_forward_impl.3} parent=0 // pred_check
    _
  $region3: #{_lstm_feature_forward_impl.3} parent=0 // pred_check_branch
    %15 = sbr.rel (0) target = $region5
  $region4: #{_lstm_feature_forward_impl.3} parent=0 // pred_region
    _
  $region5: #{_lstm_feature_forward_impl.3} parent=0 // pred_fallthru
    _
  // Predicated region
  $region6: #{_lstm_feature_forward_impl.3} parent=0 // pred_check
    _
  $region7: #{_lstm_feature_forward_impl.3} parent=0 // pred_check_branch
    %17 = sbr.rel (0) target = $region9
  $region8: #{_lstm_feature_forward_impl.3} parent=0 // pred_region
    _
  $region9: #{_lstm_feature_forward_impl.3} parent=0 // pred_fallthru
    _
  // Predicated region
  $region10: #{_lstm_feature_forward_impl.3} parent=0 // pred_check
    _
  $region11: #{_lstm_feature_forward_impl.3} parent=0 // pred_check_branch
    %19 = sbr.rel (0) target = $region13
  $region12: #{_lstm_feature_forward_impl.3} parent=0 // pred_region
    _
  $region13: #{_lstm_feature_forward_impl.3} parent=0 // pred_fallthru
    _
  // Predicated region
  $region14: #{_lstm_feature_forward_impl.3} parent=0 // pred_check
    _
  $region15: #{_lstm_feature_forward_impl.3} parent=0 // pred_check_branch
    %21 = sbr.rel (0) target = $region17
  $region16: #{_lstm_feature_forward_impl.3} parent=0 // pred_region
    _
  $region17: #{_lstm_feature_forward_impl.3} parent=0 // pred_fallthru
    _
  // Predicated region
  $region18: #{_lstm_feature_forward_impl.3} parent=0 // pred_check
    _
  $region19: #{_lstm_feature_forward_impl.3} parent=0 // pred_check_branch
    %23 = sbr.rel (0) target = $region21
  $region20: #{_lstm_feature_forward_impl.3} parent=0 // pred_region
    _
  $region21: #{_lstm_feature_forward_impl.3} parent=0 // pred_fallthru
    _
  // Predicated region
  $region22: #{_lstm_feature_forward_impl.3} parent=0 // pred_check
    _
  $region23: #{_lstm_feature_forward_impl.3} parent=0 // pred_check_branch
    %25 = sbr.rel (0) target = $region25
  $region24: #{_lstm_feature_forward_impl.3} parent=0 // pred_region
    _
  $region25: #{_lstm_feature_forward_impl.3} parent=0 // pred_fallthru
    _
  // Predicated region
  $region26: #{_lstm_feature_forward_impl.3} parent=0 // pred_check
    _
  $region27: #{_lstm_feature_forward_impl.3} parent=0 // pred_check_branch
    %27 = sbr.rel (0) target = $region29
  $region28: #{_lstm_feature_forward_impl.3} parent=0 // pred_region
    _
  $region29: #{_lstm_feature_forward_impl.3} parent=0 // pred_fallthru
    _
  // Predicated region
  $region30: #{_lstm_feature_forward_impl.3} parent=0 // pred_check
    _
  $region31: #{_lstm_feature_forward_impl.3} parent=0 // pred_check_branch
    %29 = sbr.rel (0) target = $region33
  $region32: #{_lstm_feature_forward_impl.3} parent=0 // pred_region
    _
  $region33: #{_lstm_feature_forward_impl.3} parent=0 // pred_fallthru
    _
  // Predicated region
  $region34: #{_lstm_feature_forward_impl.3} parent=0 // pred_check
    _
  $region35: #{_lstm_feature_forward_impl.3} parent=0 // pred_check_branch
    %31 = sbr.rel (0) target = $region37
  $region36: #{_lstm_feature_forward_impl.3} parent=0 // pred_region
    _
  $region37: #{_lstm_feature_forward_impl.3} parent=0 // pred_fallthru
    _
  %v32 = vld [vmem:[%s0] sm:$0xff]
  %v33 = vld [vmem:[%s0 + $0x8] sm:$0xff]
  %v34 = vld [vmem:[%s0 + $0x10] sm:$0xff]
  %v35 = vld [vmem:[%s0 + $0x18] sm:$0xff]
  %v36 = vld [vmem:[%s0 + $0x20] sm:$0xff]
  %v37 = vld [vmem:[%s0 + $0x28] sm:$0xff]
  %v38 = vld [vmem:[%s0 + $0x30] sm:$0xff]
  %v39 = vld [vmem:[%s0 + $0x38] sm:$0xff]
  %v40 = vld [vmem:[%s4] sm:$0xff]
  %v41 = vld [vmem:[%s4 + $0x8] sm:$0xff]
  %v42 = vld [vmem:[%s6] sm:$0xf]
  %v44 = vperm.slane %v42, 0
  %v45 = vperm.slane %v42, 1
  %v46 = vperm.slane %v42, 2
  %v47 = vperm.slane %v42, 3
  %54 = vst [vmem:[#allocation1] ss:$2 sm:$0xff] %v40
  %s55 = scalar_lea.vmem [#allocation1], 16
  %56 = vst [vmem:[%s55] ss:$2 sm:$0xff] %v41
  %v57 = vld.sshfl [vmem:[#allocation1] sm:$0xff pattern:$0x75316420]
  %v58 = vld.sshfl [vmem:[#allocation1 + $0x8] sm:$0xff pattern:$0x75316420]
  %v59 = vld.sshfl [vmem:[#allocation1 + $0x10] sm:$0xff pattern:$0x75316420]
  %v60 = vld.sshfl [vmem:[#allocation1 + $0x18] sm:$0xff pattern:$0x75316420]
  %vm61 = vcmask 31744
  %v63 = vsel %vm61, %v32, 0
  %v66 = vsel %vm61, %v33, 0
  %v69 = vsel %vm61, %v34, 0
  %v72 = vsel %vm61, %v35, 0
  %v75 = vsel %vm61, %v36, 0
  %v78 = vsel %vm61, %v37, 0
  %v81 = vsel %vm61, %v38, 0
  %v84 = vsel %vm61, %v39, 0
  %vm86 = vcmask 1043456
  %v87 = vsel %vm86, %v57, 0
  %v89 = vsel %vm86, %v58, 0
  %v91 = vsel %vm86, %v59, 0
  %v93 = vsel %vm86, %v60, 0
  %95 = vmatpush.msra.mxu0 0.0
  %96 = vmatpush.msra.mxu0 0.0
  %97 = vmatpush.msra.mxu0 0.0
  %98 = vmatpush.msra.mxu0 0.0
  %99 = vmatpush.msra.mxu0 0.0
  %100 = vmatpush.msra.mxu0 0.0
  %101 = vmatpush.msra.mxu0 0.0
  %102 = vmatpush.msra.mxu0 0.0
  %103 = vmatpush.msra.mxu0 0.0
  %104 = vmatpush.msra.mxu0 0.0
  %105 = vmatpush.msra.mxu0 0.0
  %106 = vmatpush.msra.mxu0 0.0
  %107 = vmatpush.msra.mxu0 0.0
  %108 = vmatpush.msra.mxu0 0.0
  %109 = vmatpush.msra.mxu0 0.0
  %110 = vmatpush.msra.mxu0 %v87
  %111 = vmatmul.f32.gmra.mxu0 %v63
  %v112 = vpop.f32.mrf.mxu0
  %v113 = vadd.f32 %v44, %v112
  %114 = vmatmul.f32.gmra.mxu0 %v66
  %v115 = vpop.f32.mrf.mxu0
  %v116 = vadd.f32 %v44, %v115
  %117 = vmatmul.f32.gmra.mxu0 %v69
  %v118 = vpop.f32.mrf.mxu0
  %v119 = vadd.f32 %v44, %v118
  %120 = vmatmul.f32.gmra.mxu0 %v72
  %v121 = vpop.f32.mrf.mxu0
  %v122 = vadd.f32 %v44, %v121
  %123 = vmatmul.f32.gmra.mxu0 %v75
  %v124 = vpop.f32.mrf.mxu0
  %v125 = vadd.f32 %v44, %v124
  %126 = vmatmul.f32.gmra.mxu0 %v78
  %v127 = vpop.f32.mrf.mxu0
  %v128 = vadd.f32 %v44, %v127
  %129 = vmatmul.f32.gmra.mxu0 %v81
  %v130 = vpop.f32.mrf.mxu0
  %v131 = vadd.f32 %v44, %v130
  %132 = vmatmul.f32.gmra.mxu0 %v84
  %v133 = vpop.f32.mrf.mxu0
  %v134 = vadd.f32 %v44, %v133
  %135 = vdwg.mxu0
  %136 = vmatpush.msra.mxu0 0.0
  %137 = vmatpush.msra.mxu0 0.0
  %138 = vmatpush.msra.mxu0 0.0
  %139 = vmatpush.msra.mxu0 0.0
  %140 = vmatpush.msra.mxu0 0.0
  %141 = vmatpush.msra.mxu0 0.0
  %142 = vmatpush.msra.mxu0 0.0
  %143 = vmatpush.msra.mxu0 0.0
  %144 = vmatpush.msra.mxu0 0.0
  %145 = vmatpush.msra.mxu0 0.0
  %146 = vmatpush.msra.mxu0 0.0
  %147 = vmatpush.msra.mxu0 0.0
  %148 = vmatpush.msra.mxu0 0.0
  %149 = vmatpush.msra.mxu0 0.0
  %150 = vmatpush.msra.mxu0 0.0
  %151 = vmatpush.msra.mxu0 %v89
  %152 = vmatmul.f32.gmra.mxu0 %v63
  %v153 = vpop.f32.mrf.mxu0
  %v154 = vadd.f32 %v45, %v153
  %155 = vmatmul.f32.gmra.mxu0 %v66
  %v156 = vpop.f32.mrf.mxu0
  %v157 = vadd.f32 %v45, %v156
  %158 = vmatmul.f32.gmra.mxu0 %v69
  %v159 = vpop.f32.mrf.mxu0
  %v160 = vadd.f32 %v45, %v159
  %161 = vmatmul.f32.gmra.mxu0 %v72
  %v162 = vpop.f32.mrf.mxu0
  %v163 = vadd.f32 %v45, %v162
  %164 = vmatmul.f32.gmra.mxu0 %v75
  %v165 = vpop.f32.mrf.mxu0
  %v166 = vadd.f32 %v45, %v165
  %167 = vmatmul.f32.gmra.mxu0 %v78
  %v168 = vpop.f32.mrf.mxu0
  %v169 = vadd.f32 %v45, %v168
  %170 = vmatmul.f32.gmra.mxu0 %v81
  %v171 = vpop.f32.mrf.mxu0
  %v172 = vadd.f32 %v45, %v171
  %173 = vmatmul.f32.gmra.mxu0 %v84
  %v174 = vpop.f32.mrf.mxu0
  %v175 = vadd.f32 %v45, %v174
  %176 = vdwg.mxu0
  %177 = vmatpush.msra.mxu0 0.0
  %178 = vmatpush.msra.mxu0 0.0
  %179 = vmatpush.msra.mxu0 0.0
  %180 = vmatpush.msra.mxu0 0.0
  %181 = vmatpush.msra.mxu0 0.0
  %182 = vmatpush.msra.mxu0 0.0
  %183 = vmatpush.msra.mxu0 0.0
  %184 = vmatpush.msra.mxu0 0.0
  %185 = vmatpush.msra.mxu0 0.0
  %186 = vmatpush.msra.mxu0 0.0
  %187 = vmatpush.msra.mxu0 0.0
  %188 = vmatpush.msra.mxu0 0.0
  %189 = vmatpush.msra.mxu0 0.0
  %190 = vmatpush.msra.mxu0 0.0
  %191 = vmatpush.msra.mxu0 0.0
  %192 = vmatpush.msra.mxu0 %v91
  %193 = vmatmul.f32.gmra.mxu0 %v63
  %v194 = vpop.f32.mrf.mxu0
  %v195 = vadd.f32 %v46, %v194
  %196 = vmatmul.f32.gmra.mxu0 %v66
  %v197 = vpop.f32.mrf.mxu0
  %v198 = vadd.f32 %v46, %v197
  %199 = vmatmul.f32.gmra.mxu0 %v69
  %v200 = vpop.f32.mrf.mxu0
  %v201 = vadd.f32 %v46, %v200
  %202 = vmatmul.f32.gmra.mxu0 %v72
  %v203 = vpop.f32.mrf.mxu0
  %v204 = vadd.f32 %v46, %v203
  %205 = vmatmul.f32.gmra.mxu0 %v75
  %v206 = vpop.f32.mrf.mxu0
  %v207 = vadd.f32 %v46, %v206
  %208 = vmatmul.f32.gmra.mxu0 %v78
  %v209 = vpop.f32.mrf.mxu0
  %v210 = vadd.f32 %v46, %v209
  %211 = vmatmul.f32.gmra.mxu0 %v81
  %v212 = vpop.f32.mrf.mxu0
  %v213 = vadd.f32 %v46, %v212
  %214 = vmatmul.f32.gmra.mxu0 %v84
  %v215 = vpop.f32.mrf.mxu0
  %v216 = vadd.f32 %v46, %v215
  %217 = vdwg.mxu0
  %218 = vmatpush.msra.mxu0 0.0
  %219 = vmatpush.msra.mxu0 0.0
  %220 = vmatpush.msra.mxu0 0.0
  %221 = vmatpush.msra.mxu0 0.0
  %222 = vmatpush.msra.mxu0 0.0
  %223 = vmatpush.msra.mxu0 0.0
  %224 = vmatpush.msra.mxu0 0.0
  %225 = vmatpush.msra.mxu0 0.0
  %226 = vmatpush.msra.mxu0 0.0
  %227 = vmatpush.msra.mxu0 0.0
  %228 = vmatpush.msra.mxu0 0.0
  %229 = vmatpush.msra.mxu0 0.0
  %230 = vmatpush.msra.mxu0 0.0
  %231 = vmatpush.msra.mxu0 0.0
  %232 = vmatpush.msra.mxu0 0.0
  %233 = vmatpush.msra.mxu0 %v93
  %234 = vmatmul.f32.gmra.mxu0 %v63
  %v235 = vpop.f32.mrf.mxu0
  %v236 = vadd.f32 %v47, %v235
  %237 = vmatmul.f32.gmra.mxu0 %v66
  %v238 = vpop.f32.mrf.mxu0
  %v239 = vadd.f32 %v47, %v238
  %240 = vmatmul.f32.gmra.mxu0 %v69
  %v241 = vpop.f32.mrf.mxu0
  %v242 = vadd.f32 %v47, %v241
  %243 = vmatmul.f32.gmra.mxu0 %v72
  %v244 = vpop.f32.mrf.mxu0
  %v245 = vadd.f32 %v47, %v244
  %246 = vmatmul.f32.gmra.mxu0 %v75
  %v247 = vpop.f32.mrf.mxu0
  %v248 = vadd.f32 %v47, %v247
  %249 = vmatmul.f32.gmra.mxu0 %v78
  %v250 = vpop.f32.mrf.mxu0
  %v251 = vadd.f32 %v47, %v250
  %252 = vmatmul.f32.gmra.mxu0 %v81
  %v253 = vpop.f32.mrf.mxu0
  %v254 = vadd.f32 %v47, %v253
  %255 = vmatmul.f32.gmra.mxu0 %v84
  %v256 = vpop.f32.mrf.mxu0
  %v257 = vadd.f32 %v47, %v256
  %258 = vdwg.mxu0
  %259 = vst [vmem:[#allocation2] sm:$0xff] %v113
  %260 = vst [vmem:[#allocation2 + $0x8] sm:$0xff] %v154
  %261 = vst [vmem:[#allocation2 + $0x10] sm:$0xff] %v195
  %262 = vst [vmem:[#allocation2 + $0x18] sm:$0xff] %v236
  %263 = vst [vmem:[#allocation2 + $0x20] sm:$0xff] %v116
  %264 = vst [vmem:[#allocation2 + $0x28] sm:$0xff] %v157
  %265 = vst [vmem:[#allocation2 + $0x30] sm:$0xff] %v198
  %266 = vst [vmem:[#allocation2 + $0x38] sm:$0xff] %v239
  %267 = vst [vmem:[#allocation2 + $0x40] sm:$0xff] %v119
  %268 = vst [vmem:[#allocation2 + $0x48] sm:$0xff] %v160
  %269 = vst [vmem:[#allocation2 + $0x50] sm:$0xff] %v201
  %270 = vst [vmem:[#allocation2 + $0x58] sm:$0xff] %v242
  %271 = vst [vmem:[#allocation2 + $0x60] sm:$0xff] %v122
  %272 = vst [vmem:[#allocation2 + $0x68] sm:$0xff] %v163
  %273 = vst [vmem:[#allocation2 + $0x70] sm:$0xff] %v204
  %274 = vst [vmem:[#allocation2 + $0x78] sm:$0xff] %v245
  %275 = vst [vmem:[#allocation2 + $0x80] sm:$0xff] %v125
  %276 = vst [vmem:[#allocation2 + $0x88] sm:$0xff] %v166
  %277 = vst [vmem:[#allocation2 + $0x90] sm:$0xff] %v207
  %278 = vst [vmem:[#allocation2 + $0x98] sm:$0xff] %v248
  %279 = vst [vmem:[#allocation2 + $0xa0] sm:$0xff] %v128
  %280 = vst [vmem:[#allocation2 + $0xa8] sm:$0xff] %v169
  %281 = vst [vmem:[#allocation2 + $0xb0] sm:$0xff] %v210
  %282 = vst [vmem:[#allocation2 + $0xb8] sm:$0xff] %v251
  %283 = vst [vmem:[#allocation2 + $0xc0] sm:$0xff] %v131
  %284 = vst [vmem:[#allocation2 + $0xc8] sm:$0xff] %v172
  %285 = vst [vmem:[#allocation2 + $0xd0] sm:$0xff] %v213
  %286 = vst [vmem:[#allocation2 + $0xd8] sm:$0xff] %v254
  %287 = vst [vmem:[#allocation2 + $0xe0] sm:$0xff] %v134
  %288 = vst [vmem:[#allocation2 + $0xe8] sm:$0xff] %v175
  %289 = vst [vmem:[#allocation2 + $0xf0] sm:$0xff] %v216
  %290 = vst [vmem:[#allocation2 + $0xf8] sm:$0xff] %v257
  %v291 = vld [vmem:[%s2] sm:$0xff]
  %v292 = vld [vmem:[%s3] sm:$0xff]
  %v293 = vld [vmem:[#allocation2] sm:$0xff]
  %v294 = vld [vmem:[#allocation2 + $0x8] sm:$0xff]
  %v295 = vld [vmem:[#allocation2 + $0x10] sm:$0xff]
  %v296 = vld [vmem:[#allocation2 + $0x18] sm:$0xff]
  %v297 = vld [vmem:[%s5] sm:$0xff]
  %v298 = vld [vmem:[%s5 + $0x8] sm:$0xff]
  %v299 = vld [vmem:[%s5 + $0x10] sm:$0xff]
  %v300 = vld [vmem:[%s5 + $0x18] sm:$0xff]
  %v301 = vld [vmem:[%s5 + $0x20] sm:$0xff]
  %v302 = vld [vmem:[%s5 + $0x28] sm:$0xff]
  %v303 = vld [vmem:[%s5 + $0x30] sm:$0xff]
  %v304 = vld [vmem:[%s5 + $0x38] sm:$0xff]
  %v305 = vld [vmem:[%s5 + $0x40] sm:$0xff]
  %v306 = vld [vmem:[%s5 + $0x48] sm:$0xff]
  %v307 = vld [vmem:[%s5 + $0x50] sm:$0xff]
  %v308 = vld [vmem:[%s5 + $0x58] sm:$0xff]
  %v309 = vld [vmem:[%s5 + $0x60] sm:$0xff]
  %v310 = vld [vmem:[%s5 + $0x68] sm:$0xff]
  %v311 = vld [vmem:[%s5 + $0x70] sm:$0xff]
  %v312 = vld [vmem:[%s5 + $0x78] sm:$0xff]
  %v313 = vld [vmem:[%s5 + $0x80] sm:$0xff]
  %v314 = vld [vmem:[%s5 + $0x88] sm:$0xff]
  %v315 = vld [vmem:[%s5 + $0x90] sm:$0xff]
  %v316 = vld [vmem:[%s5 + $0x98] sm:$0xff]
  %v317 = vld [vmem:[%s5 + $0xa0] sm:$0xff]
  %v318 = vld [vmem:[%s5 + $0xa8] sm:$0xff]
  %v319 = vld [vmem:[%s5 + $0xb0] sm:$0xff]
  %v320 = vld [vmem:[%s5 + $0xb8] sm:$0xff]
  %v321 = vld [vmem:[%s5 + $0xc0] sm:$0xff]
  %v322 = vld [vmem:[%s5 + $0xc8] sm:$0xff]
  %v323 = vld [vmem:[%s5 + $0xd0] sm:$0xff]
  %v324 = vld [vmem:[%s5 + $0xd8] sm:$0xff]
  %v325 = vld [vmem:[%s5 + $0xe0] sm:$0xff]
  %v326 = vld [vmem:[%s5 + $0xe8] sm:$0xff]
  %v327 = vld [vmem:[%s5 + $0xf0] sm:$0xff]
  %v328 = vld [vmem:[%s5 + $0xf8] sm:$0xff]
  %v329 = vld [vmem:[%s5 + $0x100] sm:$0xff]
  %v330 = vld [vmem:[%s5 + $0x108] sm:$0xff]
  %v331 = vld [vmem:[%s5 + $0x110] sm:$0xff]
  %v332 = vld [vmem:[%s5 + $0x118] sm:$0xff]
  %v333 = vld [vmem:[%s5 + $0x120] sm:$0xff]
  %v334 = vld [vmem:[%s5 + $0x128] sm:$0xff]
  %v335 = vld [vmem:[%s5 + $0x130] sm:$0xff]
  %v336 = vld [vmem:[%s5 + $0x138] sm:$0xff]
  %v337 = vld [vmem:[%s5 + $0x140] sm:$0xff]
  %v338 = vld [vmem:[%s5 + $0x148] sm:$0xff]
  %v339 = vld [vmem:[%s5 + $0x150] sm:$0xff]
  %v340 = vld [vmem:[%s5 + $0x158] sm:$0xff]
  %v341 = vld [vmem:[%s5 + $0x160] sm:$0xff]
  %v342 = vld [vmem:[%s5 + $0x168] sm:$0xff]
  %v343 = vld [vmem:[%s5 + $0x170] sm:$0xff]
  %v344 = vld [vmem:[%s5 + $0x178] sm:$0xff]
  %v345 = vld [vmem:[%s5 + $0x180] sm:$0xff]
  %v346 = vld [vmem:[%s5 + $0x188] sm:$0xff]
  %v347 = vld [vmem:[%s5 + $0x190] sm:$0xff]
  %v348 = vld [vmem:[%s5 + $0x198] sm:$0xff]
  %v349 = vld [vmem:[%s5 + $0x1a0] sm:$0xff]
  %v350 = vld [vmem:[%s5 + $0x1a8] sm:$0xff]
  %v351 = vld [vmem:[%s5 + $0x1b0] sm:$0xff]
  %v352 = vld [vmem:[%s5 + $0x1b8] sm:$0xff]
  %v353 = vld [vmem:[%s5 + $0x1c0] sm:$0xff]
  %v354 = vld [vmem:[%s5 + $0x1c8] sm:$0xff]
  %v355 = vld [vmem:[%s5 + $0x1d0] sm:$0xff]
  %v356 = vld [vmem:[%s5 + $0x1d8] sm:$0xff]
  %v357 = vld [vmem:[%s5 + $0x1e0] sm:$0xff]
  %v358 = vld [vmem:[%s5 + $0x1e8] sm:$0xff]
  %v359 = vld [vmem:[%s5 + $0x1f0] sm:$0xff]
  %v360 = vld [vmem:[%s5 + $0x1f8] sm:$0xff]
  %361 = vmatpush.msra.mxu0 %v357
  %362 = vmatpush.msra.mxu0 %v353
  %363 = vmatpush.msra.mxu0 %v349
  %364 = vmatpush.msra.mxu0 %v345
  %365 = vmatpush.msra.mxu0 %v341
  %366 = vmatpush.msra.mxu0 %v337
  %367 = vmatpush.msra.mxu0 %v333
  %368 = vmatpush.msra.mxu0 %v329
  %369 = vmatpush.msra.mxu0 %v325
  %370 = vmatpush.msra.mxu0 %v321
  %371 = vmatpush.msra.mxu0 %v317
  %372 = vmatpush.msra.mxu0 %v313
  %373 = vmatpush.msra.mxu0 %v309
  %374 = vmatpush.msra.mxu0 %v305
  %375 = vmatpush.msra.mxu0 %v301
  %376 = vmatpush.msra.mxu0 %v297
  %377 = vmatmul.f32.gmra.mxu0 %v291
  %v378 = vpop.f32.mrf.mxu0
  %v379 = vadd.f32 0.0, %v378
  %380 = vdwg.mxu0
  %381 = vmatpush.msra.mxu0 %v358
  %382 = vmatpush.msra.mxu0 %v354
  %383 = vmatpush.msra.mxu0 %v350
  %384 = vmatpush.msra.mxu0 %v346
  %385 = vmatpush.msra.mxu0 %v342
  %386 = vmatpush.msra.mxu0 %v338
  %387 = vmatpush.msra.mxu0 %v334
  %388 = vmatpush.msra.mxu0 %v330
  %389 = vmatpush.msra.mxu0 %v326
  %390 = vmatpush.msra.mxu0 %v322
  %391 = vmatpush.msra.mxu0 %v318
  %392 = vmatpush.msra.mxu0 %v314
  %393 = vmatpush.msra.mxu0 %v310
  %394 = vmatpush.msra.mxu0 %v306
  %395 = vmatpush.msra.mxu0 %v302
  %396 = vmatpush.msra.mxu0 %v298
  %397 = vmatmul.f32.gmra.mxu0 %v291
  %v398 = vpop.f32.mrf.mxu0
  %v399 = vadd.f32 0.0, %v398
  %400 = vdwg.mxu0
  %401 = vmatpush.msra.mxu0 %v359
  %402 = vmatpush.msra.mxu0 %v355
  %403 = vmatpush.msra.mxu0 %v351
  %404 = vmatpush.msra.mxu0 %v347
  %405 = vmatpush.msra.mxu0 %v343
  %406 = vmatpush.msra.mxu0 %v339
  %407 = vmatpush.msra.mxu0 %v335
  %408 = vmatpush.msra.mxu0 %v331
  %409 = vmatpush.msra.mxu0 %v327
  %410 = vmatpush.msra.mxu0 %v323
  %411 = vmatpush.msra.mxu0 %v319
  %412 = vmatpush.msra.mxu0 %v315
  %413 = vmatpush.msra.mxu0 %v311
  %414 = vmatpush.msra.mxu0 %v307
  %415 = vmatpush.msra.mxu0 %v303
  %416 = vmatpush.msra.mxu0 %v299
  %417 = vmatmul.f32.gmra.mxu0 %v291
  %v418 = vpop.f32.mrf.mxu0
  %v419 = vadd.f32 0.0, %v418
  %420 = vdwg.mxu0
  %421 = vmatpush.msra.mxu0 %v360
  %422 = vmatpush.msra.mxu0 %v356
  %423 = vmatpush.msra.mxu0 %v352
  %424 = vmatpush.msra.mxu0 %v348
  %425 = vmatpush.msra.mxu0 %v344
  %426 = vmatpush.msra.mxu0 %v340
  %427 = vmatpush.msra.mxu0 %v336
  %428 = vmatpush.msra.mxu0 %v332
  %429 = vmatpush.msra.mxu0 %v328
  %430 = vmatpush.msra.mxu0 %v324
  %431 = vmatpush.msra.mxu0 %v320
  %432 = vmatpush.msra.mxu0 %v316
  %433 = vmatpush.msra.mxu0 %v312
  %434 = vmatpush.msra.mxu0 %v308
  %435 = vmatpush.msra.mxu0 %v304
  %436 = vmatpush.msra.mxu0 %v300
  %437 = vmatmul.f32.gmra.mxu0 %v291
  %v438 = vpop.f32.mrf.mxu0
  %v439 = vadd.f32 0.0, %v438
  %440 = vdwg.mxu0
  %v441 = vadd.f32 %v293, %v379
  %v442 = vadd.f32 %v294, %v399
  %v443 = vadd.f32 %v295, %v419
  %v444 = vadd.f32 %v296, %v439
  %v445 = vxor.u32 %v441, 2147483648
  %v446 = vxor.u32 %v442, 2147483648
  %v447 = vxor.u32 %v443, 2147483648
  %v448 = vmul.f32 %v445, 1.442695
  %v449 = vpow.pop %v448
  %v450 = vmul.f32 %v446, 1.442695
  %v451 = vpow.pop %v450
  %v452 = vmul.f32 %v447, 1.442695
  %v453 = vpow.pop %v452
  %v454 = vadd.f32 %v449, 1.0
  %v455 = vadd.f32 %v451, 1.0
  %v456 = vadd.f32 %v453, 1.0
  %v457 = vrcp.pop %v454
  %v458 = vmul.f32 %v454, %v457
  %v459 = vsub.f32 1.0, %v458
  %v460 = vmul.f32 %v457, %v459
  %v461 = vadd.f32 %v457, %v460
  %vm462 = vweird.f32 %v454
  %vm463 = vweird.f32 %v457
  %vm464 = vmor %vm462, %vm463
  %v465 = vsel %vm464, %v457, %v461
  %v466 = vand.u32 2147483647, %v454
  %vm467 = vcmp.eq.f32.partialorder %v466, 8.507059e+37
  %v468 = vand.u32 %v454, 2147483648
  %v469 = vor.u32 1.1754944e-38, %v468
  %v470 = vsel %vm467, %v469, %v465
  %v471 = vmul.f32 1.0, %v470
  %v472 = vrcp.pop %v455
  %v473 = vmul.f32 %v455, %v472
  %v474 = vsub.f32 1.0, %v473
  %v475 = vmul.f32 %v472, %v474
  %v476 = vadd.f32 %v472, %v475
  %vm477 = vweird.f32 %v455
  %vm478 = vweird.f32 %v472
  %vm479 = vmor %vm477, %vm478
  %v480 = vsel %vm479, %v472, %v476
  %v481 = vand.u32 2147483647, %v455
  %vm482 = vcmp.eq.f32.partialorder %v481, 8.507059e+37
  %v483 = vand.u32 %v455, 2147483648
  %v484 = vor.u32 1.1754944e-38, %v483
  %v485 = vsel %vm482, %v484, %v480
  %v486 = vmul.f32 1.0, %v485
  %v487 = vrcp.pop %v456
  %v488 = vmul.f32 %v456, %v487
  %v489 = vsub.f32 1.0, %v488
  %v490 = vmul.f32 %v487, %v489
  %v491 = vadd.f32 %v487, %v490
  %vm492 = vweird.f32 %v456
  %vm493 = vweird.f32 %v487
  %vm494 = vmor %vm492, %vm493
  %v495 = vsel %vm494, %v487, %v491
  %v496 = vand.u32 2147483647, %v456
  %vm497 = vcmp.eq.f32.partialorder %v496, 8.507059e+37
  %v498 = vand.u32 %v456, 2147483648
  %v499 = vor.u32 1.1754944e-38, %v498
  %v500 = vsel %vm497, %v499, %v495
  %v501 = vmul.f32 1.0, %v500
  %v502 = vtanh.pop %v444
  %v503 = vmul.f32 %v486, %v292
  %v504 = vmul.f32 %v471, %v502
  %v505 = vadd.f32 %v503, %v504
  %v506 = vtanh.pop %v505
  %v507 = vmul.f32 %v501, %v506
  %v508 = vld [vmem:[#allocation2 + $0x20] sm:$0xff]
  %v509 = vld [vmem:[#allocation2 + $0x28] sm:$0xff]
  %v510 = vld [vmem:[#allocation2 + $0x30] sm:$0xff]
  %v511 = vld [vmem:[#allocation2 + $0x38] sm:$0xff]
  %512 = vmatpush.msra.mxu0 %v357
  %513 = vmatpush.msra.mxu0 %v353
  %514 = vmatpush.msra.mxu0 %v349
  %515 = vmatpush.msra.mxu0 %v345
  %516 = vmatpush.msra.mxu0 %v341
  %517 = vmatpush.msra.mxu0 %v337
  %518 = vmatpush.msra.mxu0 %v333
  %519 = vmatpush.msra.mxu0 %v329
  %520 = vmatpush.msra.mxu0 %v325
  %521 = vmatpush.msra.mxu0 %v321
  %522 = vmatpush.msra.mxu0 %v317
  %523 = vmatpush.msra.mxu0 %v313
  %524 = vmatpush.msra.mxu0 %v309
  %525 = vmatpush.msra.mxu0 %v305
  %526 = vmatpush.msra.mxu0 %v301
  %527 = vmatpush.msra.mxu0 %v297
  %528 = vmatmul.f32.gmra.mxu0 %v507
  %v529 = vpop.f32.mrf.mxu0
  %v530 = vadd.f32 0.0, %v529
  %531 = vdwg.mxu0
  %532 = vmatpush.msra.mxu0 %v358
  %533 = vmatpush.msra.mxu0 %v354
  %534 = vmatpush.msra.mxu0 %v350
  %535 = vmatpush.msra.mxu0 %v346
  %536 = vmatpush.msra.mxu0 %v342
  %537 = vmatpush.msra.mxu0 %v338
  %538 = vmatpush.msra.mxu0 %v334
  %539 = vmatpush.msra.mxu0 %v330
  %540 = vmatpush.msra.mxu0 %v326
  %541 = vmatpush.msra.mxu0 %v322
  %542 = vmatpush.msra.mxu0 %v318
  %543 = vmatpush.msra.mxu0 %v314
  %544 = vmatpush.msra.mxu0 %v310
  %545 = vmatpush.msra.mxu0 %v306
  %546 = vmatpush.msra.mxu0 %v302
  %547 = vmatpush.msra.mxu0 %v298
  %548 = vmatmul.f32.gmra.mxu0 %v507
  %v549 = vpop.f32.mrf.mxu0
  %v550 = vadd.f32 0.0, %v549
  %551 = vdwg.mxu0
  %552 = vmatpush.msra.mxu0 %v359
  %553 = vmatpush.msra.mxu0 %v355
  %554 = vmatpush.msra.mxu0 %v351
  %555 = vmatpush.msra.mxu0 %v347
  %556 = vmatpush.msra.mxu0 %v343
  %557 = vmatpush.msra.mxu0 %v339
  %558 = vmatpush.msra.mxu0 %v335
  %559 = vmatpush.msra.mxu0 %v331
  %560 = vmatpush.msra.mxu0 %v327
  %561 = vmatpush.msra.mxu0 %v323
  %562 = vmatpush.msra.mxu0 %v319
  %563 = vmatpush.msra.mxu0 %v315
  %564 = vmatpush.msra.mxu0 %v311
  %565 = vmatpush.msra.mxu0 %v307
  %566 = vmatpush.msra.mxu0 %v303
  %567 = vmatpush.msra.mxu0 %v299
  %568 = vmatmul.f32.gmra.mxu0 %v507
  %v569 = vpop.f32.mrf.mxu0
  %v570 = vadd.f32 0.0, %v569
  %571 = vdwg.mxu0
  %572 = vmatpush.msra.mxu0 %v360
  %573 = vmatpush.msra.mxu0 %v356
  %574 = vmatpush.msra.mxu0 %v352
  %575 = vmatpush.msra.mxu0 %v348
  %576 = vmatpush.msra.mxu0 %v344
  %577 = vmatpush.msra.mxu0 %v340
  %578 = vmatpush.msra.mxu0 %v336
  %579 = vmatpush.msra.mxu0 %v332
  %580 = vmatpush.msra.mxu0 %v328
  %581 = vmatpush.msra.mxu0 %v324
  %582 = vmatpush.msra.mxu0 %v320
  %583 = vmatpush.msra.mxu0 %v316
  %584 = vmatpush.msra.mxu0 %v312
  %585 = vmatpush.msra.mxu0 %v308
  %586 = vmatpush.msra.mxu0 %v304
  %587 = vmatpush.msra.mxu0 %v300
  %588 = vmatmul.f32.gmra.mxu0 %v507
  %v589 = vpop.f32.mrf.mxu0
  %v590 = vadd.f32 0.0, %v589
  %591 = vdwg.mxu0
  %v592 = vadd.f32 %v508, %v530
  %v593 = vadd.f32 %v509, %v550
  %v594 = vadd.f32 %v510, %v570
  %v595 = vadd.f32 %v511, %v590
  %v596 = vxor.u32 %v592, 2147483648
  %v597 = vxor.u32 %v593, 2147483648
  %v598 = vxor.u32 %v594, 2147483648
  %v599 = vmul.f32 %v596, 1.442695
  %v600 = vpow.pop %v599
  %v601 = vmul.f32 %v597, 1.442695
  %v602 = vpow.pop %v601
  %v603 = vmul.f32 %v598, 1.442695
  %v604 = vpow.pop %v603
  %v605 = vadd.f32 %v600, 1.0
  %v606 = vadd.f32 %v602, 1.0
  %v607 = vadd.f32 %v604, 1.0
  %v608 = vrcp.pop %v605
  %v609 = vmul.f32 %v605, %v608
  %v610 = vsub.f32 1.0, %v609
  %v611 = vmul.f32 %v608, %v610
  %v612 = vadd.f32 %v608, %v611
  %vm613 = vweird.f32 %v605
  %vm614 = vweird.f32 %v608
  %vm615 = vmor %vm613, %vm614
  %v616 = vsel %vm615, %v608, %v612
  %v617 = vand.u32 2147483647, %v605
  %vm618 = vcmp.eq.f32.partialorder %v617, 8.507059e+37
  %v619 = vand.u32 %v605, 2147483648
  %v620 = vor.u32 1.1754944e-38, %v619
  %v621 = vsel %vm618, %v620, %v616
  %v622 = vmul.f32 1.0, %v621
  %v623 = vrcp.pop %v606
  %v624 = vmul.f32 %v606, %v623
  %v625 = vsub.f32 1.0, %v624
  %v626 = vmul.f32 %v623, %v625
  %v627 = vadd.f32 %v623, %v626
  %vm628 = vweird.f32 %v606
  %vm629 = vweird.f32 %v623
  %vm630 = vmor %vm628, %vm629
  %v631 = vsel %vm630, %v623, %v627
  %v632 = vand.u32 2147483647, %v606
  %vm633 = vcmp.eq.f32.partialorder %v632, 8.507059e+37
  %v634 = vand.u32 %v606, 2147483648
  %v635 = vor.u32 1.1754944e-38, %v634
  %v636 = vsel %vm633, %v635, %v631
  %v637 = vmul.f32 1.0, %v636
  %v638 = vrcp.pop %v607
  %v639 = vmul.f32 %v607, %v638
  %v640 = vsub.f32 1.0, %v639
  %v641 = vmul.f32 %v638, %v640
  %v642 = vadd.f32 %v638, %v641
  %vm643 = vweird.f32 %v607
  %vm644 = vweird.f32 %v638
  %vm645 = vmor %vm643, %vm644
  %v646 = vsel %vm645, %v638, %v642
  %v647 = vand.u32 2147483647, %v607
  %vm648 = vcmp.eq.f32.partialorder %v647, 8.507059e+37
  %v649 = vand.u32 %v607, 2147483648
  %v650 = vor.u32 1.1754944e-38, %v649
  %v651 = vsel %vm648, %v650, %v646
  %v652 = vmul.f32 1.0, %v651
  %v653 = vtanh.pop %v595
  %v654 = vmul.f32 %v637, %v505
  %v655 = vmul.f32 %v622, %v653
  %v656 = vadd.f32 %v654, %v655
  %v657 = vtanh.pop %v656
  %v658 = vmul.f32 %v652, %v657
  %v659 = vld [vmem:[#allocation2 + $0x40] sm:$0xff]
  %v660 = vld [vmem:[#allocation2 + $0x48] sm:$0xff]
  %v661 = vld [vmem:[#allocation2 + $0x50] sm:$0xff]
  %v662 = vld [vmem:[#allocation2 + $0x58] sm:$0xff]
  %663 = vmatpush.msra.mxu0 %v357
  %664 = vmatpush.msra.mxu0 %v353
  %665 = vmatpush.msra.mxu0 %v349
  %666 = vmatpush.msra.mxu0 %v345
  %667 = vmatpush.msra.mxu0 %v341
  %668 = vmatpush.msra.mxu0 %v337
  %669 = vmatpush.msra.mxu0 %v333
  %670 = vmatpush.msra.mxu0 %v329
  %671 = vmatpush.msra.mxu0 %v325
  %672 = vmatpush.msra.mxu0 %v321
  %673 = vmatpush.msra.mxu0 %v317
  %674 = vmatpush.msra.mxu0 %v313
  %675 = vmatpush.msra.mxu0 %v309
  %676 = vmatpush.msra.mxu0 %v305
  %677 = vmatpush.msra.mxu0 %v301
  %678 = vmatpush.msra.mxu0 %v297
  %679 = vmatmul.f32.gmra.mxu0 %v658
  %v680 = vpop.f32.mrf.mxu0
  %v681 = vadd.f32 0.0, %v680
  %682 = vdwg.mxu0
  %683 = vmatpush.msra.mxu0 %v358
  %684 = vmatpush.msra.mxu0 %v354
  %685 = vmatpush.msra.mxu0 %v350
  %686 = vmatpush.msra.mxu0 %v346
  %687 = vmatpush.msra.mxu0 %v342
  %688 = vmatpush.msra.mxu0 %v338
  %689 = vmatpush.msra.mxu0 %v334
  %690 = vmatpush.msra.mxu0 %v330
  %691 = vmatpush.msra.mxu0 %v326
  %692 = vmatpush.msra.mxu0 %v322
  %693 = vmatpush.msra.mxu0 %v318
  %694 = vmatpush.msra.mxu0 %v314
  %695 = vmatpush.msra.mxu0 %v310
  %696 = vmatpush.msra.mxu0 %v306
  %697 = vmatpush.msra.mxu0 %v302
  %698 = vmatpush.msra.mxu0 %v298
  %699 = vmatmul.f32.gmra.mxu0 %v658
  %v700 = vpop.f32.mrf.mxu0
  %v701 = vadd.f32 0.0, %v700
  %702 = vdwg.mxu0
  %703 = vmatpush.msra.mxu0 %v359
  %704 = vmatpush.msra.mxu0 %v355
  %705 = vmatpush.msra.mxu0 %v351
  %706 = vmatpush.msra.mxu0 %v347
  %707 = vmatpush.msra.mxu0 %v343
  %708 = vmatpush.msra.mxu0 %v339
  %709 = vmatpush.msra.mxu0 %v335
  %710 = vmatpush.msra.mxu0 %v331
  %711 = vmatpush.msra.mxu0 %v327
  %712 = vmatpush.msra.mxu0 %v323
  %713 = vmatpush.msra.mxu0 %v319
  %714 = vmatpush.msra.mxu0 %v315
  %715 = vmatpush.msra.mxu0 %v311
  %716 = vmatpush.msra.mxu0 %v307
  %717 = vmatpush.msra.mxu0 %v303
  %718 = vmatpush.msra.mxu0 %v299
  %719 = vmatmul.f32.gmra.mxu0 %v658
  %v720 = vpop.f32.mrf.mxu0
  %v721 = vadd.f32 0.0, %v720
  %722 = vdwg.mxu0
  %723 = vmatpush.msra.mxu0 %v360
  %724 = vmatpush.msra.mxu0 %v356
  %725 = vmatpush.msra.mxu0 %v352
  %726 = vmatpush.msra.mxu0 %v348
  %727 = vmatpush.msra.mxu0 %v344
  %728 = vmatpush.msra.mxu0 %v340
  %729 = vmatpush.msra.mxu0 %v336
  %730 = vmatpush.msra.mxu0 %v332
  %731 = vmatpush.msra.mxu0 %v328
  %732 = vmatpush.msra.mxu0 %v324
  %733 = vmatpush.msra.mxu0 %v320
  %734 = vmatpush.msra.mxu0 %v316
  %735 = vmatpush.msra.mxu0 %v312
  %736 = vmatpush.msra.mxu0 %v308
  %737 = vmatpush.msra.mxu0 %v304
  %738 = vmatpush.msra.mxu0 %v300
  %739 = vmatmul.f32.gmra.mxu0 %v658
  %v740 = vpop.f32.mrf.mxu0
  %v741 = vadd.f32 0.0, %v740
  %742 = vdwg.mxu0
  %v743 = vadd.f32 %v659, %v681
  %v744 = vadd.f32 %v660, %v701
  %v745 = vadd.f32 %v661, %v721
  %v746 = vadd.f32 %v662, %v741
  %v747 = vxor.u32 %v743, 2147483648
  %v748 = vxor.u32 %v744, 2147483648
  %v749 = vxor.u32 %v745, 2147483648
  %v750 = vmul.f32 %v747, 1.442695
  %v751 = vpow.pop %v750
  %v752 = vmul.f32 %v748, 1.442695
  %v753 = vpow.pop %v752
  %v754 = vmul.f32 %v749, 1.442695
  %v755 = vpow.pop %v754
  %v756 = vadd.f32 %v751, 1.0
  %v757 = vadd.f32 %v753, 1.0
  %v758 = vadd.f32 %v755, 1.0
  %v759 = vrcp.pop %v756
  %v760 = vmul.f32 %v756, %v759
  %v761 = vsub.f32 1.0, %v760
  %v762 = vmul.f32 %v759, %v761
  %v763 = vadd.f32 %v759, %v762
  %vm764 = vweird.f32 %v756
  %vm765 = vweird.f32 %v759
  %vm766 = vmor %vm764, %vm765
  %v767 = vsel %vm766, %v759, %v763
  %v768 = vand.u32 2147483647, %v756
  %vm769 = vcmp.eq.f32.partialorder %v768, 8.507059e+37
  %v770 = vand.u32 %v756, 2147483648
  %v771 = vor.u32 1.1754944e-38, %v770
  %v772 = vsel %vm769, %v771, %v767
  %v773 = vmul.f32 1.0, %v772
  %v774 = vrcp.pop %v757
  %v775 = vmul.f32 %v757, %v774
  %v776 = vsub.f32 1.0, %v775
  %v777 = vmul.f32 %v774, %v776
  %v778 = vadd.f32 %v774, %v777
  %vm779 = vweird.f32 %v757
  %vm780 = vweird.f32 %v774
  %vm781 = vmor %vm779, %vm780
  %v782 = vsel %vm781, %v774, %v778
  %v783 = vand.u32 2147483647, %v757
  %vm784 = vcmp.eq.f32.partialorder %v783, 8.507059e+37
  %v785 = vand.u32 %v757, 2147483648
  %v786 = vor.u32 1.1754944e-38, %v785
  %v787 = vsel %vm784, %v786, %v782
  %v788 = vmul.f32 1.0, %v787
  %v789 = vrcp.pop %v758
  %v790 = vmul.f32 %v758, %v789
  %v791 = vsub.f32 1.0, %v790
  %v792 = vmul.f32 %v789, %v791
  %v793 = vadd.f32 %v789, %v792
  %vm794 = vweird.f32 %v758
  %vm795 = vweird.f32 %v789
  %vm796 = vmor %vm794, %vm795
  %v797 = vsel %vm796, %v789, %v793
  %v798 = vand.u32 2147483647, %v758
  %vm799 = vcmp.eq.f32.partialorder %v798, 8.507059e+37
  %v800 = vand.u32 %v758, 2147483648
  %v801 = vor.u32 1.1754944e-38, %v800
  %v802 = vsel %vm799, %v801, %v797
  %v803 = vmul.f32 1.0, %v802
  %v804 = vtanh.pop %v746
  %v805 = vmul.f32 %v788, %v656
  %v806 = vmul.f32 %v773, %v804
  %v807 = vadd.f32 %v805, %v806
  %v808 = vtanh.pop %v807
  %v809 = vmul.f32 %v803, %v808
  %v810 = vld [vmem:[#allocation2 + $0x60] sm:$0xff]
  %v811 = vld [vmem:[#allocation2 + $0x68] sm:$0xff]
  %v812 = vld [vmem:[#allocation2 + $0x70] sm:$0xff]
  %v813 = vld [vmem:[#allocation2 + $0x78] sm:$0xff]
  %814 = vmatpush.msra.mxu0 %v357
  %815 = vmatpush.msra.mxu0 %v353
  %816 = vmatpush.msra.mxu0 %v349
  %817 = vmatpush.msra.mxu0 %v345
  %818 = vmatpush.msra.mxu0 %v341
  %819 = vmatpush.msra.mxu0 %v337
  %820 = vmatpush.msra.mxu0 %v333
  %821 = vmatpush.msra.mxu0 %v329
  %822 = vmatpush.msra.mxu0 %v325
  %823 = vmatpush.msra.mxu0 %v321
  %824 = vmatpush.msra.mxu0 %v317
  %825 = vmatpush.msra.mxu0 %v313
  %826 = vmatpush.msra.mxu0 %v309
  %827 = vmatpush.msra.mxu0 %v305
  %828 = vmatpush.msra.mxu0 %v301
  %829 = vmatpush.msra.mxu0 %v297
  %830 = vmatmul.f32.gmra.mxu0 %v809
  %v831 = vpop.f32.mrf.mxu0
  %v832 = vadd.f32 0.0, %v831
  %833 = vdwg.mxu0
  %834 = vmatpush.msra.mxu0 %v358
  %835 = vmatpush.msra.mxu0 %v354
  %836 = vmatpush.msra.mxu0 %v350
  %837 = vmatpush.msra.mxu0 %v346
  %838 = vmatpush.msra.mxu0 %v342
  %839 = vmatpush.msra.mxu0 %v338
  %840 = vmatpush.msra.mxu0 %v334
  %841 = vmatpush.msra.mxu0 %v330
  %842 = vmatpush.msra.mxu0 %v326
  %843 = vmatpush.msra.mxu0 %v322
  %844 = vmatpush.msra.mxu0 %v318
  %845 = vmatpush.msra.mxu0 %v314
  %846 = vmatpush.msra.mxu0 %v310
  %847 = vmatpush.msra.mxu0 %v306
  %848 = vmatpush.msra.mxu0 %v302
  %849 = vmatpush.msra.mxu0 %v298
  %850 = vmatmul.f32.gmra.mxu0 %v809
  %v851 = vpop.f32.mrf.mxu0
  %v852 = vadd.f32 0.0, %v851
  %853 = vdwg.mxu0
  %854 = vmatpush.msra.mxu0 %v359
  %855 = vmatpush.msra.mxu0 %v355
  %856 = vmatpush.msra.mxu0 %v351
  %857 = vmatpush.msra.mxu0 %v347
  %858 = vmatpush.msra.mxu0 %v343
  %859 = vmatpush.msra.mxu0 %v339
  %860 = vmatpush.msra.mxu0 %v335
  %861 = vmatpush.msra.mxu0 %v331
  %862 = vmatpush.msra.mxu0 %v327
  %863 = vmatpush.msra.mxu0 %v323
  %864 = vmatpush.msra.mxu0 %v319
  %865 = vmatpush.msra.mxu0 %v315
  %866 = vmatpush.msra.mxu0 %v311
  %867 = vmatpush.msra.mxu0 %v307
  %868 = vmatpush.msra.mxu0 %v303
  %869 = vmatpush.msra.mxu0 %v299
  %870 = vmatmul.f32.gmra.mxu0 %v809
  %v871 = vpop.f32.mrf.mxu0
  %v872 = vadd.f32 0.0, %v871
  %873 = vdwg.mxu0
  %874 = vmatpush.msra.mxu0 %v360
  %875 = vmatpush.msra.mxu0 %v356
  %876 = vmatpush.msra.mxu0 %v352
  %877 = vmatpush.msra.mxu0 %v348
  %878 = vmatpush.msra.mxu0 %v344
  %879 = vmatpush.msra.mxu0 %v340
  %880 = vmatpush.msra.mxu0 %v336
  %881 = vmatpush.msra.mxu0 %v332
  %882 = vmatpush.msra.mxu0 %v328
  %883 = vmatpush.msra.mxu0 %v324
  %884 = vmatpush.msra.mxu0 %v320
  %885 = vmatpush.msra.mxu0 %v316
  %886 = vmatpush.msra.mxu0 %v312
  %887 = vmatpush.msra.mxu0 %v308
  %888 = vmatpush.msra.mxu0 %v304
  %889 = vmatpush.msra.mxu0 %v300
  %890 = vmatmul.f32.gmra.mxu0 %v809
  %v891 = vpop.f32.mrf.mxu0
  %v892 = vadd.f32 0.0, %v891
  %893 = vdwg.mxu0
  %v894 = vadd.f32 %v810, %v832
  %v895 = vadd.f32 %v811, %v852
  %v896 = vadd.f32 %v812, %v872
  %v897 = vadd.f32 %v813, %v892
  %v898 = vxor.u32 %v894, 2147483648
  %v899 = vxor.u32 %v895, 2147483648
  %v900 = vxor.u32 %v896, 2147483648
  %v901 = vmul.f32 %v898, 1.442695
  %v902 = vpow.pop %v901
  %v903 = vmul.f32 %v899, 1.442695
  %v904 = vpow.pop %v903
  %v905 = vmul.f32 %v900, 1.442695
  %v906 = vpow.pop %v905
  %v907 = vadd.f32 %v902, 1.0
  %v908 = vadd.f32 %v904, 1.0
  %v909 = vadd.f32 %v906, 1.0
  %v910 = vrcp.pop %v907
  %v911 = vmul.f32 %v907, %v910
  %v912 = vsub.f32 1.0, %v911
  %v913 = vmul.f32 %v910, %v912
  %v914 = vadd.f32 %v910, %v913
  %vm915 = vweird.f32 %v907
  %vm916 = vweird.f32 %v910
  %vm917 = vmor %vm915, %vm916
  %v918 = vsel %vm917, %v910, %v914
  %v919 = vand.u32 2147483647, %v907
  %vm920 = vcmp.eq.f32.partialorder %v919, 8.507059e+37
  %v921 = vand.u32 %v907, 2147483648
  %v922 = vor.u32 1.1754944e-38, %v921
  %v923 = vsel %vm920, %v922, %v918
  %v924 = vmul.f32 1.0, %v923
  %v925 = vrcp.pop %v908
  %v926 = vmul.f32 %v908, %v925
  %v927 = vsub.f32 1.0, %v926
  %v928 = vmul.f32 %v925, %v927
  %v929 = vadd.f32 %v925, %v928
  %vm930 = vweird.f32 %v908
  %vm931 = vweird.f32 %v925
  %vm932 = vmor %vm930, %vm931
  %v933 = vsel %vm932, %v925, %v929
  %v934 = vand.u32 2147483647, %v908
  %vm935 = vcmp.eq.f32.partialorder %v934, 8.507059e+37
  %v936 = vand.u32 %v908, 2147483648
  %v937 = vor.u32 1.1754944e-38, %v936
  %v938 = vsel %vm935, %v937, %v933
  %v939 = vmul.f32 1.0, %v938
  %v940 = vrcp.pop %v909
  %v941 = vmul.f32 %v909, %v940
  %v942 = vsub.f32 1.0, %v941
  %v943 = vmul.f32 %v940, %v942
  %v944 = vadd.f32 %v940, %v943
  %vm945 = vweird.f32 %v909
  %vm946 = vweird.f32 %v940
  %vm947 = vmor %vm945, %vm946
  %v948 = vsel %vm947, %v940, %v944
  %v949 = vand.u32 2147483647, %v909
  %vm950 = vcmp.eq.f32.partialorder %v949, 8.507059e+37
  %v951 = vand.u32 %v909, 2147483648
  %v952 = vor.u32 1.1754944e-38, %v951
  %v953 = vsel %vm950, %v952, %v948
  %v954 = vmul.f32 1.0, %v953
  %v955 = vtanh.pop %v897
  %v956 = vmul.f32 %v939, %v807
  %v957 = vmul.f32 %v924, %v955
  %v958 = vadd.f32 %v956, %v957
  %v959 = vtanh.pop %v958
  %v960 = vmul.f32 %v954, %v959
  %v961 = vld [vmem:[#allocation2 + $0x80] sm:$0xff]
  %v962 = vld [vmem:[#allocation2 + $0x88] sm:$0xff]
  %v963 = vld [vmem:[#allocation2 + $0x90] sm:$0xff]
  %v964 = vld [vmem:[#allocation2 + $0x98] sm:$0xff]
  %965 = vmatpush.msra.mxu0 %v357
  %966 = vmatpush.msra.mxu0 %v353
  %967 = vmatpush.msra.mxu0 %v349
  %968 = vmatpush.msra.mxu0 %v345
  %969 = vmatpush.msra.mxu0 %v341
  %970 = vmatpush.msra.mxu0 %v337
  %971 = vmatpush.msra.mxu0 %v333
  %972 = vmatpush.msra.mxu0 %v329
  %973 = vmatpush.msra.mxu0 %v325
  %974 = vmatpush.msra.mxu0 %v321
  %975 = vmatpush.msra.mxu0 %v317
  %976 = vmatpush.msra.mxu0 %v313
  %977 = vmatpush.msra.mxu0 %v309
  %978 = vmatpush.msra.mxu0 %v305
  %979 = vmatpush.msra.mxu0 %v301
  %980 = vmatpush.msra.mxu0 %v297
  %981 = vmatmul.f32.gmra.mxu0 %v960
  %v982 = vpop.f32.mrf.mxu0
  %v983 = vadd.f32 0.0, %v982
  %984 = vdwg.mxu0
  %985 = vmatpush.msra.mxu0 %v358
  %986 = vmatpush.msra.mxu0 %v354
  %987 = vmatpush.msra.mxu0 %v350
  %988 = vmatpush.msra.mxu0 %v346
  %989 = vmatpush.msra.mxu0 %v342
  %990 = vmatpush.msra.mxu0 %v338
  %991 = vmatpush.msra.mxu0 %v334
  %992 = vmatpush.msra.mxu0 %v330
  %993 = vmatpush.msra.mxu0 %v326
  %994 = vmatpush.msra.mxu0 %v322
  %995 = vmatpush.msra.mxu0 %v318
  %996 = vmatpush.msra.mxu0 %v314
  %997 = vmatpush.msra.mxu0 %v310
  %998 = vmatpush.msra.mxu0 %v306
  %999 = vmatpush.msra.mxu0 %v302
  %1000 = vmatpush.msra.mxu0 %v298
  %1001 = vmatmul.f32.gmra.mxu0 %v960
  %v1002 = vpop.f32.mrf.mxu0
  %v1003 = vadd.f32 0.0, %v1002
  %1004 = vdwg.mxu0
  %1005 = vmatpush.msra.mxu0 %v359
  %1006 = vmatpush.msra.mxu0 %v355
  %1007 = vmatpush.msra.mxu0 %v351
  %1008 = vmatpush.msra.mxu0 %v347
  %1009 = vmatpush.msra.mxu0 %v343
  %1010 = vmatpush.msra.mxu0 %v339
  %1011 = vmatpush.msra.mxu0 %v335
  %1012 = vmatpush.msra.mxu0 %v331
  %1013 = vmatpush.msra.mxu0 %v327
  %1014 = vmatpush.msra.mxu0 %v323
  %1015 = vmatpush.msra.mxu0 %v319
  %1016 = vmatpush.msra.mxu0 %v315
  %1017 = vmatpush.msra.mxu0 %v311
  %1018 = vmatpush.msra.mxu0 %v307
  %1019 = vmatpush.msra.mxu0 %v303
  %1020 = vmatpush.msra.mxu0 %v299
  %1021 = vmatmul.f32.gmra.mxu0 %v960
  %v1022 = vpop.f32.mrf.mxu0
  %v1023 = vadd.f32 0.0, %v1022
  %1024 = vdwg.mxu0
  %1025 = vmatpush.msra.mxu0 %v360
  %1026 = vmatpush.msra.mxu0 %v356
  %1027 = vmatpush.msra.mxu0 %v352
  %1028 = vmatpush.msra.mxu0 %v348
  %1029 = vmatpush.msra.mxu0 %v344
  %1030 = vmatpush.msra.mxu0 %v340
  %1031 = vmatpush.msra.mxu0 %v336
  %1032 = vmatpush.msra.mxu0 %v332
  %1033 = vmatpush.msra.mxu0 %v328
  %1034 = vmatpush.msra.mxu0 %v324
  %1035 = vmatpush.msra.mxu0 %v320
  %1036 = vmatpush.msra.mxu0 %v316
  %1037 = vmatpush.msra.mxu0 %v312
  %1038 = vmatpush.msra.mxu0 %v308
  %1039 = vmatpush.msra.mxu0 %v304
  %1040 = vmatpush.msra.mxu0 %v300
  %1041 = vmatmul.f32.gmra.mxu0 %v960
  %v1042 = vpop.f32.mrf.mxu0
  %v1043 = vadd.f32 0.0, %v1042
  %1044 = vdwg.mxu0
  %v1045 = vadd.f32 %v961, %v983
  %v1046 = vadd.f32 %v962, %v1003
  %v1047 = vadd.f32 %v963, %v1023
  %v1048 = vadd.f32 %v964, %v1043
  %v1049 = vxor.u32 %v1045, 2147483648
  %v1050 = vxor.u32 %v1046, 2147483648
  %v1051 = vxor.u32 %v1047, 2147483648
  %v1052 = vmul.f32 %v1049, 1.442695
  %v1053 = vpow.pop %v1052
  %v1054 = vmul.f32 %v1050, 1.442695
  %v1055 = vpow.pop %v1054
  %v1056 = vmul.f32 %v1051, 1.442695
  %v1057 = vpow.pop %v1056
  %v1058 = vadd.f32 %v1053, 1.0
  %v1059 = vadd.f32 %v1055, 1.0
  %v1060 = vadd.f32 %v1057, 1.0
  %v1061 = vrcp.pop %v1058
  %v1062 = vmul.f32 %v1058, %v1061
  %v1063 = vsub.f32 1.0, %v1062
  %v1064 = vmul.f32 %v1061, %v1063
  %v1065 = vadd.f32 %v1061, %v1064
  %vm1066 = vweird.f32 %v1058
  %vm1067 = vweird.f32 %v1061
  %vm1068 = vmor %vm1066, %vm1067
  %v1069 = vsel %vm1068, %v1061, %v1065
  %v1070 = vand.u32 2147483647, %v1058
  %vm1071 = vcmp.eq.f32.partialorder %v1070, 8.507059e+37
  %v1072 = vand.u32 %v1058, 2147483648
  %v1073 = vor.u32 1.1754944e-38, %v1072
  %v1074 = vsel %vm1071, %v1073, %v1069
  %v1075 = vmul.f32 1.0, %v1074
  %v1076 = vrcp.pop %v1059
  %v1077 = vmul.f32 %v1059, %v1076
  %v1078 = vsub.f32 1.0, %v1077
  %v1079 = vmul.f32 %v1076, %v1078
  %v1080 = vadd.f32 %v1076, %v1079
  %vm1081 = vweird.f32 %v1059
  %vm1082 = vweird.f32 %v1076
  %vm1083 = vmor %vm1081, %vm1082
  %v1084 = vsel %vm1083, %v1076, %v1080
  %v1085 = vand.u32 2147483647, %v1059
  %vm1086 = vcmp.eq.f32.partialorder %v1085, 8.507059e+37
  %v1087 = vand.u32 %v1059, 2147483648
  %v1088 = vor.u32 1.1754944e-38, %v1087
  %v1089 = vsel %vm1086, %v1088, %v1084
  %v1090 = vmul.f32 1.0, %v1089
  %v1091 = vrcp.pop %v1060
  %v1092 = vmul.f32 %v1060, %v1091
  %v1093 = vsub.f32 1.0, %v1092
  %v1094 = vmul.f32 %v1091, %v1093
  %v1095 = vadd.f32 %v1091, %v1094
  %vm1096 = vweird.f32 %v1060
  %vm1097 = vweird.f32 %v1091
  %vm1098 = vmor %vm1096, %vm1097
  %v1099 = vsel %vm1098, %v1091, %v1095
  %v1100 = vand.u32 2147483647, %v1060
  %vm1101 = vcmp.eq.f32.partialorder %v1100, 8.507059e+37
  %v1102 = vand.u32 %v1060, 2147483648
  %v1103 = vor.u32 1.1754944e-38, %v1102
  %v1104 = vsel %vm1101, %v1103, %v1099
  %v1105 = vmul.f32 1.0, %v1104
  %v1106 = vtanh.pop %v1048
  %v1107 = vmul.f32 %v1090, %v958
  %v1108 = vmul.f32 %v1075, %v1106
  %v1109 = vadd.f32 %v1107, %v1108
  %v1110 = vtanh.pop %v1109
  %v1111 = vmul.f32 %v1105, %v1110
  %v1112 = vld [vmem:[#allocation2 + $0xa0] sm:$0xff]
  %v1113 = vld [vmem:[#allocation2 + $0xa8] sm:$0xff]
  %v1114 = vld [vmem:[#allocation2 + $0xb0] sm:$0xff]
  %v1115 = vld [vmem:[#allocation2 + $0xb8] sm:$0xff]
  %1116 = vmatpush.msra.mxu0 %v357
  %1117 = vmatpush.msra.mxu0 %v353
  %1118 = vmatpush.msra.mxu0 %v349
  %1119 = vmatpush.msra.mxu0 %v345
  %1120 = vmatpush.msra.mxu0 %v341
  %1121 = vmatpush.msra.mxu0 %v337
  %1122 = vmatpush.msra.mxu0 %v333
  %1123 = vmatpush.msra.mxu0 %v329
  %1124 = vmatpush.msra.mxu0 %v325
  %1125 = vmatpush.msra.mxu0 %v321
  %1126 = vmatpush.msra.mxu0 %v317
  %1127 = vmatpush.msra.mxu0 %v313
  %1128 = vmatpush.msra.mxu0 %v309
  %1129 = vmatpush.msra.mxu0 %v305
  %1130 = vmatpush.msra.mxu0 %v301
  %1131 = vmatpush.msra.mxu0 %v297
  %1132 = vmatmul.f32.gmra.mxu0 %v1111
  %v1133 = vpop.f32.mrf.mxu0
  %v1134 = vadd.f32 0.0, %v1133
  %1135 = vdwg.mxu0
  %1136 = vmatpush.msra.mxu0 %v358
  %1137 = vmatpush.msra.mxu0 %v354
  %1138 = vmatpush.msra.mxu0 %v350
  %1139 = vmatpush.msra.mxu0 %v346
  %1140 = vmatpush.msra.mxu0 %v342
  %1141 = vmatpush.msra.mxu0 %v338
  %1142 = vmatpush.msra.mxu0 %v334
  %1143 = vmatpush.msra.mxu0 %v330
  %1144 = vmatpush.msra.mxu0 %v326
  %1145 = vmatpush.msra.mxu0 %v322
  %1146 = vmatpush.msra.mxu0 %v318
  %1147 = vmatpush.msra.mxu0 %v314
  %1148 = vmatpush.msra.mxu0 %v310
  %1149 = vmatpush.msra.mxu0 %v306
  %1150 = vmatpush.msra.mxu0 %v302
  %1151 = vmatpush.msra.mxu0 %v298
  %1152 = vmatmul.f32.gmra.mxu0 %v1111
  %v1153 = vpop.f32.mrf.mxu0
  %v1154 = vadd.f32 0.0, %v1153
  %1155 = vdwg.mxu0
  %1156 = vmatpush.msra.mxu0 %v359
  %1157 = vmatpush.msra.mxu0 %v355
  %1158 = vmatpush.msra.mxu0 %v351
  %1159 = vmatpush.msra.mxu0 %v347
  %1160 = vmatpush.msra.mxu0 %v343
  %1161 = vmatpush.msra.mxu0 %v339
  %1162 = vmatpush.msra.mxu0 %v335
  %1163 = vmatpush.msra.mxu0 %v331
  %1164 = vmatpush.msra.mxu0 %v327
  %1165 = vmatpush.msra.mxu0 %v323
  %1166 = vmatpush.msra.mxu0 %v319
  %1167 = vmatpush.msra.mxu0 %v315
  %1168 = vmatpush.msra.mxu0 %v311
  %1169 = vmatpush.msra.mxu0 %v307
  %1170 = vmatpush.msra.mxu0 %v303
  %1171 = vmatpush.msra.mxu0 %v299
  %1172 = vmatmul.f32.gmra.mxu0 %v1111
  %v1173 = vpop.f32.mrf.mxu0
  %v1174 = vadd.f32 0.0, %v1173
  %1175 = vdwg.mxu0
  %1176 = vmatpush.msra.mxu0 %v360
  %1177 = vmatpush.msra.mxu0 %v356
  %1178 = vmatpush.msra.mxu0 %v352
  %1179 = vmatpush.msra.mxu0 %v348
  %1180 = vmatpush.msra.mxu0 %v344
  %1181 = vmatpush.msra.mxu0 %v340
  %1182 = vmatpush.msra.mxu0 %v336
  %1183 = vmatpush.msra.mxu0 %v332
  %1184 = vmatpush.msra.mxu0 %v328
  %1185 = vmatpush.msra.mxu0 %v324
  %1186 = vmatpush.msra.mxu0 %v320
  %1187 = vmatpush.msra.mxu0 %v316
  %1188 = vmatpush.msra.mxu0 %v312
  %1189 = vmatpush.msra.mxu0 %v308
  %1190 = vmatpush.msra.mxu0 %v304
  %1191 = vmatpush.msra.mxu0 %v300
  %1192 = vmatmul.f32.gmra.mxu0 %v1111
  %v1193 = vpop.f32.mrf.mxu0
  %v1194 = vadd.f32 0.0, %v1193
  %1195 = vdwg.mxu0
  %v1196 = vadd.f32 %v1112, %v1134
  %v1197 = vadd.f32 %v1113, %v1154
  %v1198 = vadd.f32 %v1114, %v1174
  %v1199 = vadd.f32 %v1115, %v1194
  %v1200 = vxor.u32 %v1196, 2147483648
  %v1201 = vxor.u32 %v1197, 2147483648
  %v1202 = vxor.u32 %v1198, 2147483648
  %v1203 = vmul.f32 %v1200, 1.442695
  %v1204 = vpow.pop %v1203
  %v1205 = vmul.f32 %v1201, 1.442695
  %v1206 = vpow.pop %v1205
  %v1207 = vmul.f32 %v1202, 1.442695
  %v1208 = vpow.pop %v1207
  %v1209 = vadd.f32 %v1204, 1.0
  %v1210 = vadd.f32 %v1206, 1.0
  %v1211 = vadd.f32 %v1208, 1.0
  %v1212 = vrcp.pop %v1209
  %v1213 = vmul.f32 %v1209, %v1212
  %v1214 = vsub.f32 1.0, %v1213
  %v1215 = vmul.f32 %v1212, %v1214
  %v1216 = vadd.f32 %v1212, %v1215
  %vm1217 = vweird.f32 %v1209
  %vm1218 = vweird.f32 %v1212
  %vm1219 = vmor %vm1217, %vm1218
  %v1220 = vsel %vm1219, %v1212, %v1216
  %v1221 = vand.u32 2147483647, %v1209
  %vm1222 = vcmp.eq.f32.partialorder %v1221, 8.507059e+37
  %v1223 = vand.u32 %v1209, 2147483648
  %v1224 = vor.u32 1.1754944e-38, %v1223
  %v1225 = vsel %vm1222, %v1224, %v1220
  %v1226 = vmul.f32 1.0, %v1225
  %v1227 = vrcp.pop %v1210
  %v1228 = vmul.f32 %v1210, %v1227
  %v1229 = vsub.f32 1.0, %v1228
  %v1230 = vmul.f32 %v1227, %v1229
  %v1231 = vadd.f32 %v1227, %v1230
  %vm1232 = vweird.f32 %v1210
  %vm1233 = vweird.f32 %v1227
  %vm1234 = vmor %vm1232, %vm1233
  %v1235 = vsel %vm1234, %v1227, %v1231
  %v1236 = vand.u32 2147483647, %v1210
  %vm1237 = vcmp.eq.f32.partialorder %v1236, 8.507059e+37
  %v1238 = vand.u32 %v1210, 2147483648
  %v1239 = vor.u32 1.1754944e-38, %v1238
  %v1240 = vsel %vm1237, %v1239, %v1235
  %v1241 = vmul.f32 1.0, %v1240
  %v1242 = vrcp.pop %v1211
  %v1243 = vmul.f32 %v1211, %v1242
  %v1244 = vsub.f32 1.0, %v1243
  %v1245 = vmul.f32 %v1242, %v1244
  %v1246 = vadd.f32 %v1242, %v1245
  %vm1247 = vweird.f32 %v1211
  %vm1248 = vweird.f32 %v1242
  %vm1249 = vmor %vm1247, %vm1248
  %v1250 = vsel %vm1249, %v1242, %v1246
  %v1251 = vand.u32 2147483647, %v1211
  %vm1252 = vcmp.eq.f32.partialorder %v1251, 8.507059e+37
  %v1253 = vand.u32 %v1211, 2147483648
  %v1254 = vor.u32 1.1754944e-38, %v1253
  %v1255 = vsel %vm1252, %v1254, %v1250
  %v1256 = vmul.f32 1.0, %v1255
  %v1257 = vtanh.pop %v1199
  %v1258 = vmul.f32 %v1241, %v1109
  %v1259 = vmul.f32 %v1226, %v1257
  %v1260 = vadd.f32 %v1258, %v1259
  %v1261 = vtanh.pop %v1260
  %v1262 = vmul.f32 %v1256, %v1261
  %v1263 = vld [vmem:[#allocation2 + $0xc0] sm:$0xff]
  %v1264 = vld [vmem:[#allocation2 + $0xc8] sm:$0xff]
  %v1265 = vld [vmem:[#allocation2 + $0xd0] sm:$0xff]
  %v1266 = vld [vmem:[#allocation2 + $0xd8] sm:$0xff]
  %1267 = vmatpush.msra.mxu0 %v357
  %1268 = vmatpush.msra.mxu0 %v353
  %1269 = vmatpush.msra.mxu0 %v349
  %1270 = vmatpush.msra.mxu0 %v345
  %1271 = vmatpush.msra.mxu0 %v341
  %1272 = vmatpush.msra.mxu0 %v337
  %1273 = vmatpush.msra.mxu0 %v333
  %1274 = vmatpush.msra.mxu0 %v329
  %1275 = vmatpush.msra.mxu0 %v325
  %1276 = vmatpush.msra.mxu0 %v321
  %1277 = vmatpush.msra.mxu0 %v317
  %1278 = vmatpush.msra.mxu0 %v313
  %1279 = vmatpush.msra.mxu0 %v309
  %1280 = vmatpush.msra.mxu0 %v305
  %1281 = vmatpush.msra.mxu0 %v301
  %1282 = vmatpush.msra.mxu0 %v297
  %1283 = vmatmul.f32.gmra.mxu0 %v1262
  %v1284 = vpop.f32.mrf.mxu0
  %v1285 = vadd.f32 0.0, %v1284
  %1286 = vdwg.mxu0
  %1287 = vmatpush.msra.mxu0 %v358
  %1288 = vmatpush.msra.mxu0 %v354
  %1289 = vmatpush.msra.mxu0 %v350
  %1290 = vmatpush.msra.mxu0 %v346
  %1291 = vmatpush.msra.mxu0 %v342
  %1292 = vmatpush.msra.mxu0 %v338
  %1293 = vmatpush.msra.mxu0 %v334
  %1294 = vmatpush.msra.mxu0 %v330
  %1295 = vmatpush.msra.mxu0 %v326
  %1296 = vmatpush.msra.mxu0 %v322
  %1297 = vmatpush.msra.mxu0 %v318
  %1298 = vmatpush.msra.mxu0 %v314
  %1299 = vmatpush.msra.mxu0 %v310
  %1300 = vmatpush.msra.mxu0 %v306
  %1301 = vmatpush.msra.mxu0 %v302
  %1302 = vmatpush.msra.mxu0 %v298
  %1303 = vmatmul.f32.gmra.mxu0 %v1262
  %v1304 = vpop.f32.mrf.mxu0
  %v1305 = vadd.f32 0.0, %v1304
  %1306 = vdwg.mxu0
  %1307 = vmatpush.msra.mxu0 %v359
  %1308 = vmatpush.msra.mxu0 %v355
  %1309 = vmatpush.msra.mxu0 %v351
  %1310 = vmatpush.msra.mxu0 %v347
  %1311 = vmatpush.msra.mxu0 %v343
  %1312 = vmatpush.msra.mxu0 %v339
  %1313 = vmatpush.msra.mxu0 %v335
  %1314 = vmatpush.msra.mxu0 %v331
  %1315 = vmatpush.msra.mxu0 %v327
  %1316 = vmatpush.msra.mxu0 %v323
  %1317 = vmatpush.msra.mxu0 %v319
  %1318 = vmatpush.msra.mxu0 %v315
  %1319 = vmatpush.msra.mxu0 %v311
  %1320 = vmatpush.msra.mxu0 %v307
  %1321 = vmatpush.msra.mxu0 %v303
  %1322 = vmatpush.msra.mxu0 %v299
  %1323 = vmatmul.f32.gmra.mxu0 %v1262
  %v1324 = vpop.f32.mrf.mxu0
  %v1325 = vadd.f32 0.0, %v1324
  %1326 = vdwg.mxu0
  %1327 = vmatpush.msra.mxu0 %v360
  %1328 = vmatpush.msra.mxu0 %v356
  %1329 = vmatpush.msra.mxu0 %v352
  %1330 = vmatpush.msra.mxu0 %v348
  %1331 = vmatpush.msra.mxu0 %v344
  %1332 = vmatpush.msra.mxu0 %v340
  %1333 = vmatpush.msra.mxu0 %v336
  %1334 = vmatpush.msra.mxu0 %v332
  %1335 = vmatpush.msra.mxu0 %v328
  %1336 = vmatpush.msra.mxu0 %v324
  %1337 = vmatpush.msra.mxu0 %v320
  %1338 = vmatpush.msra.mxu0 %v316
  %1339 = vmatpush.msra.mxu0 %v312
  %1340 = vmatpush.msra.mxu0 %v308
  %1341 = vmatpush.msra.mxu0 %v304
  %1342 = vmatpush.msra.mxu0 %v300
  %1343 = vmatmul.f32.gmra.mxu0 %v1262
  %v1344 = vpop.f32.mrf.mxu0
  %v1345 = vadd.f32 0.0, %v1344
  %1346 = vdwg.mxu0
  %v1347 = vadd.f32 %v1263, %v1285
  %v1348 = vadd.f32 %v1264, %v1305
  %v1349 = vadd.f32 %v1265, %v1325
  %v1350 = vadd.f32 %v1266, %v1345
  %v1351 = vxor.u32 %v1347, 2147483648
  %v1352 = vxor.u32 %v1348, 2147483648
  %v1353 = vxor.u32 %v1349, 2147483648
  %v1354 = vmul.f32 %v1351, 1.442695
  %v1355 = vpow.pop %v1354
  %v1356 = vmul.f32 %v1352, 1.442695
  %v1357 = vpow.pop %v1356
  %v1358 = vmul.f32 %v1353, 1.442695
  %v1359 = vpow.pop %v1358
  %v1360 = vadd.f32 %v1355, 1.0
  %v1361 = vadd.f32 %v1357, 1.0
  %v1362 = vadd.f32 %v1359, 1.0
  %v1363 = vrcp.pop %v1360
  %v1364 = vmul.f32 %v1360, %v1363
  %v1365 = vsub.f32 1.0, %v1364
  %v1366 = vmul.f32 %v1363, %v1365
  %v1367 = vadd.f32 %v1363, %v1366
  %vm1368 = vweird.f32 %v1360
  %vm1369 = vweird.f32 %v1363
  %vm1370 = vmor %vm1368, %vm1369
  %v1371 = vsel %vm1370, %v1363, %v1367
  %v1372 = vand.u32 2147483647, %v1360
  %vm1373 = vcmp.eq.f32.partialorder %v1372, 8.507059e+37
  %v1374 = vand.u32 %v1360, 2147483648
  %v1375 = vor.u32 1.1754944e-38, %v1374
  %v1376 = vsel %vm1373, %v1375, %v1371
  %v1377 = vmul.f32 1.0, %v1376
  %v1378 = vrcp.pop %v1361
  %v1379 = vmul.f32 %v1361, %v1378
  %v1380 = vsub.f32 1.0, %v1379
  %v1381 = vmul.f32 %v1378, %v1380
  %v1382 = vadd.f32 %v1378, %v1381
  %vm1383 = vweird.f32 %v1361
  %vm1384 = vweird.f32 %v1378
  %vm1385 = vmor %vm1383, %vm1384
  %v1386 = vsel %vm1385, %v1378, %v1382
  %v1387 = vand.u32 2147483647, %v1361
  %vm1388 = vcmp.eq.f32.partialorder %v1387, 8.507059e+37
  %v1389 = vand.u32 %v1361, 2147483648
  %v1390 = vor.u32 1.1754944e-38, %v1389
  %v1391 = vsel %vm1388, %v1390, %v1386
  %v1392 = vmul.f32 1.0, %v1391
  %v1393 = vrcp.pop %v1362
  %v1394 = vmul.f32 %v1362, %v1393
  %v1395 = vsub.f32 1.0, %v1394
  %v1396 = vmul.f32 %v1393, %v1395
  %v1397 = vadd.f32 %v1393, %v1396
  %vm1398 = vweird.f32 %v1362
  %vm1399 = vweird.f32 %v1393
  %vm1400 = vmor %vm1398, %vm1399
  %v1401 = vsel %vm1400, %v1393, %v1397
  %v1402 = vand.u32 2147483647, %v1362
  %vm1403 = vcmp.eq.f32.partialorder %v1402, 8.507059e+37
  %v1404 = vand.u32 %v1362, 2147483648
  %v1405 = vor.u32 1.1754944e-38, %v1404
  %v1406 = vsel %vm1403, %v1405, %v1401
  %v1407 = vmul.f32 1.0, %v1406
  %v1408 = vtanh.pop %v1350
  %v1409 = vmul.f32 %v1392, %v1260
  %v1410 = vmul.f32 %v1377, %v1408
  %v1411 = vadd.f32 %v1409, %v1410
  %v1412 = vtanh.pop %v1411
  %v1413 = vmul.f32 %v1407, %v1412
  %v1414 = vld [vmem:[#allocation2 + $0xe0] sm:$0xff]
  %v1415 = vld [vmem:[#allocation2 + $0xe8] sm:$0xff]
  %v1416 = vld [vmem:[#allocation2 + $0xf0] sm:$0xff]
  %v1417 = vld [vmem:[#allocation2 + $0xf8] sm:$0xff]
  %1418 = vmatpush.msra.mxu0 %v357
  %1419 = vmatpush.msra.mxu0 %v353
  %1420 = vmatpush.msra.mxu0 %v349
  %1421 = vmatpush.msra.mxu0 %v345
  %1422 = vmatpush.msra.mxu0 %v341
  %1423 = vmatpush.msra.mxu0 %v337
  %1424 = vmatpush.msra.mxu0 %v333
  %1425 = vmatpush.msra.mxu0 %v329
  %1426 = vmatpush.msra.mxu0 %v325
  %1427 = vmatpush.msra.mxu0 %v321
  %1428 = vmatpush.msra.mxu0 %v317
  %1429 = vmatpush.msra.mxu0 %v313
  %1430 = vmatpush.msra.mxu0 %v309
  %1431 = vmatpush.msra.mxu0 %v305
  %1432 = vmatpush.msra.mxu0 %v301
  %1433 = vmatpush.msra.mxu0 %v297
  %1434 = vmatmul.f32.gmra.mxu0 %v1413
  %v1435 = vpop.f32.mrf.mxu0
  %v1436 = vadd.f32 0.0, %v1435
  %1437 = vdwg.mxu0
  %1438 = vmatpush.msra.mxu0 %v358
  %1439 = vmatpush.msra.mxu0 %v354
  %1440 = vmatpush.msra.mxu0 %v350
  %1441 = vmatpush.msra.mxu0 %v346
  %1442 = vmatpush.msra.mxu0 %v342
  %1443 = vmatpush.msra.mxu0 %v338
  %1444 = vmatpush.msra.mxu0 %v334
  %1445 = vmatpush.msra.mxu0 %v330
  %1446 = vmatpush.msra.mxu0 %v326
  %1447 = vmatpush.msra.mxu0 %v322
  %1448 = vmatpush.msra.mxu0 %v318
  %1449 = vmatpush.msra.mxu0 %v314
  %1450 = vmatpush.msra.mxu0 %v310
  %1451 = vmatpush.msra.mxu0 %v306
  %1452 = vmatpush.msra.mxu0 %v302
  %1453 = vmatpush.msra.mxu0 %v298
  %1454 = vmatmul.f32.gmra.mxu0 %v1413
  %v1455 = vpop.f32.mrf.mxu0
  %v1456 = vadd.f32 0.0, %v1455
  %1457 = vdwg.mxu0
  %1458 = vmatpush.msra.mxu0 %v359
  %1459 = vmatpush.msra.mxu0 %v355
  %1460 = vmatpush.msra.mxu0 %v351
  %1461 = vmatpush.msra.mxu0 %v347
  %1462 = vmatpush.msra.mxu0 %v343
  %1463 = vmatpush.msra.mxu0 %v339
  %1464 = vmatpush.msra.mxu0 %v335
  %1465 = vmatpush.msra.mxu0 %v331
  %1466 = vmatpush.msra.mxu0 %v327
  %1467 = vmatpush.msra.mxu0 %v323
  %1468 = vmatpush.msra.mxu0 %v319
  %1469 = vmatpush.msra.mxu0 %v315
  %1470 = vmatpush.msra.mxu0 %v311
  %1471 = vmatpush.msra.mxu0 %v307
  %1472 = vmatpush.msra.mxu0 %v303
  %1473 = vmatpush.msra.mxu0 %v299
  %1474 = vmatmul.f32.gmra.mxu0 %v1413
  %v1475 = vpop.f32.mrf.mxu0
  %v1476 = vadd.f32 0.0, %v1475
  %1477 = vdwg.mxu0
  %1478 = vmatpush.msra.mxu0 %v360
  %1479 = vmatpush.msra.mxu0 %v356
  %1480 = vmatpush.msra.mxu0 %v352
  %1481 = vmatpush.msra.mxu0 %v348
  %1482 = vmatpush.msra.mxu0 %v344
  %1483 = vmatpush.msra.mxu0 %v340
  %1484 = vmatpush.msra.mxu0 %v336
  %1485 = vmatpush.msra.mxu0 %v332
  %1486 = vmatpush.msra.mxu0 %v328
  %1487 = vmatpush.msra.mxu0 %v324
  %1488 = vmatpush.msra.mxu0 %v320
  %1489 = vmatpush.msra.mxu0 %v316
  %1490 = vmatpush.msra.mxu0 %v312
  %1491 = vmatpush.msra.mxu0 %v308
  %1492 = vmatpush.msra.mxu0 %v304
  %1493 = vmatpush.msra.mxu0 %v300
  %1494 = vmatmul.f32.gmra.mxu0 %v1413
  %v1495 = vpop.f32.mrf.mxu0
  %v1496 = vadd.f32 0.0, %v1495
  %1497 = vdwg.mxu0
  %v1498 = vadd.f32 %v1414, %v1436
  %v1499 = vadd.f32 %v1415, %v1456
  %v1500 = vadd.f32 %v1416, %v1476
  %v1501 = vadd.f32 %v1417, %v1496
  %v1502 = vxor.u32 %v1498, 2147483648
  %v1503 = vxor.u32 %v1499, 2147483648
  %v1504 = vxor.u32 %v1500, 2147483648
  %v1505 = vmul.f32 %v1502, 1.442695
  %v1506 = vpow.pop %v1505
  %v1507 = vmul.f32 %v1503, 1.442695
  %v1508 = vpow.pop %v1507
  %v1509 = vmul.f32 %v1504, 1.442695
  %v1510 = vpow.pop %v1509
  %v1511 = vadd.f32 %v1506, 1.0
  %v1512 = vadd.f32 %v1508, 1.0
  %v1513 = vadd.f32 %v1510, 1.0
  %v1514 = vrcp.pop %v1511
  %v1515 = vmul.f32 %v1511, %v1514
  %v1516 = vsub.f32 1.0, %v1515
  %v1517 = vmul.f32 %v1514, %v1516
  %v1518 = vadd.f32 %v1514, %v1517
  %vm1519 = vweird.f32 %v1511
  %vm1520 = vweird.f32 %v1514
  %vm1521 = vmor %vm1519, %vm1520
  %v1522 = vsel %vm1521, %v1514, %v1518
  %v1523 = vand.u32 2147483647, %v1511
  %vm1524 = vcmp.eq.f32.partialorder %v1523, 8.507059e+37
  %v1525 = vand.u32 %v1511, 2147483648
  %v1526 = vor.u32 1.1754944e-38, %v1525
  %v1527 = vsel %vm1524, %v1526, %v1522
  %v1528 = vmul.f32 1.0, %v1527
  %v1529 = vrcp.pop %v1512
  %v1530 = vmul.f32 %v1512, %v1529
  %v1531 = vsub.f32 1.0, %v1530
  %v1532 = vmul.f32 %v1529, %v1531
  %v1533 = vadd.f32 %v1529, %v1532
  %vm1534 = vweird.f32 %v1512
  %vm1535 = vweird.f32 %v1529
  %vm1536 = vmor %vm1534, %vm1535
  %v1537 = vsel %vm1536, %v1529, %v1533
  %v1538 = vand.u32 2147483647, %v1512
  %vm1539 = vcmp.eq.f32.partialorder %v1538, 8.507059e+37
  %v1540 = vand.u32 %v1512, 2147483648
  %v1541 = vor.u32 1.1754944e-38, %v1540
  %v1542 = vsel %vm1539, %v1541, %v1537
  %v1543 = vmul.f32 1.0, %v1542
  %v1544 = vrcp.pop %v1513
  %v1545 = vmul.f32 %v1513, %v1544
  %v1546 = vsub.f32 1.0, %v1545
  %v1547 = vmul.f32 %v1544, %v1546
  %v1548 = vadd.f32 %v1544, %v1547
  %vm1549 = vweird.f32 %v1513
  %vm1550 = vweird.f32 %v1544
  %vm1551 = vmor %vm1549, %vm1550
  %v1552 = vsel %vm1551, %v1544, %v1548
  %v1553 = vand.u32 2147483647, %v1513
  %vm1554 = vcmp.eq.f32.partialorder %v1553, 8.507059e+37
  %v1555 = vand.u32 %v1513, 2147483648
  %v1556 = vor.u32 1.1754944e-38, %v1555
  %v1557 = vsel %vm1554, %v1556, %v1552
  %v1558 = vmul.f32 1.0, %v1557
  %v1559 = vtanh.pop %v1501
  %v1560 = vmul.f32 %v1543, %v1411
  %v1561 = vmul.f32 %v1528, %v1559
  %v1562 = vadd.f32 %v1560, %v1561
  %v1563 = vtanh.pop %v1562
  %v1564 = vmul.f32 %v1558, %v1563
  %v1565 = vld [vmem:[%s1] sm:$0xff]
  %v1566 = vld [vmem:[%s1 + $0x8] sm:$0xff]
  %v1567 = vld [vmem:[%s1 + $0x10] sm:$0xff]
  %v1568 = vld [vmem:[%s1 + $0x18] sm:$0xff]
  %v1569 = vld [vmem:[%s1 + $0x20] sm:$0xff]
  %v1570 = vld [vmem:[%s1 + $0x28] sm:$0xff]
  %v1571 = vld [vmem:[%s1 + $0x30] sm:$0xff]
  %v1572 = vld [vmem:[%s1 + $0x38] sm:$0xff]
  %1574 = vset.pattern.permute.xlu0 0
  %1575 = vperm.xlu0 %1574, %v1565
  %v1576 = vpop.permute.xlu0 %1575
  %1579 = vset.pattern.permute.xlu0 0
  %1580 = vperm.xlu0 %1579, %v1566
  %v1581 = vpop.permute.xlu0 %1580
  %1584 = vset.pattern.permute.xlu0 0
  %1585 = vperm.xlu0 %1584, %v1567
  %v1586 = vpop.permute.xlu0 %1585
  %1589 = vset.pattern.permute.xlu0 0
  %1590 = vperm.xlu0 %1589, %v1568
  %v1591 = vpop.permute.xlu0 %1590
  %1594 = vset.pattern.permute.xlu0 0
  %1595 = vperm.xlu0 %1594, %v1569
  %v1596 = vpop.permute.xlu0 %1595
  %1599 = vset.pattern.permute.xlu0 0
  %1600 = vperm.xlu0 %1599, %v1570
  %v1601 = vpop.permute.xlu0 %1600
  %1604 = vset.pattern.permute.xlu0 0
  %1605 = vperm.xlu0 %1604, %v1571
  %v1606 = vpop.permute.xlu0 %1605
  %1609 = vset.pattern.permute.xlu0 0
  %1610 = vperm.xlu0 %1609, %v1572
  %v1611 = vpop.permute.xlu0 %1610
  %v1613 = vmul.f32 %v507, %v1576
  %v1614 = vmul.f32 %v658, %v1581
  %v1615 = vmul.f32 %v809, %v1586
  %v1616 = vmul.f32 %v960, %v1591
  %v1617 = vmul.f32 %v1111, %v1596
  %v1618 = vmul.f32 %v1262, %v1601
  %v1619 = vmul.f32 %v1413, %v1606
  %v1620 = vmul.f32 %v1564, %v1611
  %v1621 = vld [vmem:[%s7] sm:$0xff]
  %v1622 = vld [vmem:[%s7 + $0x8] sm:$0xff]
  %v1623 = vld [vmem:[%s7 + $0x10] sm:$0xff]
  %v1624 = vld [vmem:[%s7 + $0x18] sm:$0xff]
  %v1625 = vld [vmem:[%s7 + $0x20] sm:$0xff]
  %v1626 = vld [vmem:[%s7 + $0x28] sm:$0xff]
  %v1627 = vld [vmem:[%s7 + $0x30] sm:$0xff]
  %v1628 = vld [vmem:[%s7 + $0x38] sm:$0xff]
  %v1629 = vld [vmem:[%s7 + $0x40] sm:$0xff]
  %v1630 = vld [vmem:[%s7 + $0x48] sm:$0xff]
  %v1631 = vld [vmem:[%s7 + $0x50] sm:$0xff]
  %v1632 = vld [vmem:[%s7 + $0x58] sm:$0xff]
  %v1633 = vld [vmem:[%s7 + $0x60] sm:$0xff]
  %v1634 = vld [vmem:[%s7 + $0x68] sm:$0xff]
  %v1635 = vld [vmem:[%s7 + $0x70] sm:$0xff]
  %v1636 = vld [vmem:[%s7 + $0x78] sm:$0xff]
  %v1637 = vld [vmem:[%s8] sm:$0x1]
  %v1639 = vperm.slane %v1637, 0
  %1641 = vmatpush.msra.mxu0 %v1636
  %1642 = vmatpush.msra.mxu0 %v1635
  %1643 = vmatpush.msra.mxu0 %v1634
  %1644 = vmatpush.msra.mxu0 %v1633
  %1645 = vmatpush.msra.mxu0 %v1632
  %1646 = vmatpush.msra.mxu0 %v1631
  %1647 = vmatpush.msra.mxu0 %v1630
  %1648 = vmatpush.msra.mxu0 %v1629
  %1649 = vmatpush.msra.mxu0 %v1628
  %1650 = vmatpush.msra.mxu0 %v1627
  %1651 = vmatpush.msra.mxu0 %v1626
  %1652 = vmatpush.msra.mxu0 %v1625
  %1653 = vmatpush.msra.mxu0 %v1624
  %1654 = vmatpush.msra.mxu0 %v1623
  %1655 = vmatpush.msra.mxu0 %v1622
  %1656 = vmatpush.msra.mxu0 %v1621
  %1657 = vmatmul.f32.gmra.mxu0 %v1613
  %v1658 = vpop.f32.mrf.mxu0
  %v1659 = vadd.f32 %v1639, %v1658
  %1660 = vmatmul.f32.gmra.mxu0 %v1614
  %v1661 = vpop.f32.mrf.mxu0
  %v1662 = vadd.f32 %v1639, %v1661
  %1663 = vmatmul.f32.gmra.mxu0 %v1615
  %v1664 = vpop.f32.mrf.mxu0
  %v1665 = vadd.f32 %v1639, %v1664
  %1666 = vmatmul.f32.gmra.mxu0 %v1616
  %v1667 = vpop.f32.mrf.mxu0
  %v1668 = vadd.f32 %v1639, %v1667
  %1669 = vmatmul.f32.gmra.mxu0 %v1617
  %v1670 = vpop.f32.mrf.mxu0
  %v1671 = vadd.f32 %v1639, %v1670
  %1672 = vmatmul.f32.gmra.mxu0 %v1618
  %v1673 = vpop.f32.mrf.mxu0
  %v1674 = vadd.f32 %v1639, %v1673
  %1675 = vmatmul.f32.gmra.mxu0 %v1619
  %v1676 = vpop.f32.mrf.mxu0
  %v1677 = vadd.f32 %v1639, %v1676
  %1678 = vmatmul.f32.gmra.mxu0 %v1620
  %v1679 = vpop.f32.mrf.mxu0
  %v1680 = vadd.f32 %v1639, %v1679
  %1681 = vdwg.mxu0
  %1682 = vst [vmem:[%s9] sm:$0xff] %v1659
  %1683 = vst [vmem:[%s9 + $0x8] sm:$0xff] %v1662
  %1684 = vst [vmem:[%s9 + $0x10] sm:$0xff] %v1665
  %1685 = vst [vmem:[%s9 + $0x18] sm:$0xff] %v1668
  %1686 = vst [vmem:[%s9 + $0x20] sm:$0xff] %v1671
  %1687 = vst [vmem:[%s9 + $0x28] sm:$0xff] %v1674
  %1688 = vst [vmem:[%s9 + $0x30] sm:$0xff] %v1677
  %1689 = vst [vmem:[%s9 + $0x38] sm:$0xff] %v1680
  // Predicated region
  $region38: #{_lstm_feature_forward_impl.3} parent=0 // pred_check
    _
  $region39: #{_lstm_feature_forward_impl.3} parent=0 // pred_check_branch
    %1691 = sbr.rel (0) target = $region41
  $region40: #{_lstm_feature_forward_impl.3} parent=0 // pred_region
    _
  $region41: #{_lstm_feature_forward_impl.3} parent=0 // pred_fallthru
    _
  // Predicated region
  $region42: #{_lstm_feature_forward_impl.3} parent=0 // pred_check
    _
  $region43: #{_lstm_feature_forward_impl.3} parent=0 // pred_check_branch
    %1693 = sbr.rel (0) target = $region45
  $region44: #{_lstm_feature_forward_impl.3} parent=0 // pred_region
    _
  $region45: #{_lstm_feature_forward_impl.3} parent=0 // pred_fallthru
    _

</llo_original>
